<compile_context>
chip_gen: v7x
topology: tpu7x:2x2x1
jax: 0.10.0
libtpu: 0.0.40
codegen_flags: <defaults>
</compile_context>

<pallas_src>
import functools

import jax
import jax.numpy as jnp
from jax.experimental import pallas as pl
from jax.experimental.pallas import tpu as pltpu

EPS = 1e-5  # torch.nn.BatchNorm2d default eps


# ---------------------------------------------------------------------------
# hardware-aware sizing helpers
# ---------------------------------------------------------------------------
def _vmem_capacity_bytes():
    try:
        info = pltpu.get_tpu_info()
        cap = getattr(info, "vmem_capacity_bytes", None)
        if cap:
            return int(cap)
    except Exception:
        pass
    return 64 * 1024 * 1024  # conservative (v7x-sized) fallback


def _pick_lane_tile(l_pad, cap):
    """Largest multiple of 128 dividing l_pad (itself a 128-multiple), <= cap."""
    best = 128
    n128 = l_pad // 128
    for k in range(1, n128 + 1):
        if n128 % k == 0 and 128 * k <= cap:
            best = 128 * k
    return best


# ---------------------------------------------------------------------------
# pass 1: per-channel sum / sum-of-squares of the two 1x1-conv outputs
#         (per-batch partials so the N axis can be split across TensorCores)
# ---------------------------------------------------------------------------
def _stats_kernel(g_ref, x_ref, wg_ref, wx_ref, stats_ref):
    @pl.when(pl.program_id(1) == 0)
    def _init():
        stats_ref[...] = jnp.zeros_like(stats_ref)

    ug = jnp.dot(wg_ref[...], g_ref[0], preferred_element_type=jnp.float32)
    ux = jnp.dot(wx_ref[...], x_ref[0], preferred_element_type=jnp.float32)

    # single coalesced accumulate: columns [sum ug, sum ug^2, sum ux, sum ux^2]
    part = jnp.concatenate(
        [jnp.sum(ug, axis=1, keepdims=True),
         jnp.sum(ug * ug, axis=1, keepdims=True),
         jnp.sum(ux, axis=1, keepdims=True),
         jnp.sum(ux * ux, axis=1, keepdims=True)], axis=1)        # (F_int, 4)
    stats_ref[...] += part[None]


# ---------------------------------------------------------------------------
# pass 2: ReLU(BN(g1)+BN(x1)) -> psi pre-activation + its (per-batch) statistics
# ---------------------------------------------------------------------------
def _psi_pre_kernel(g_ref, x_ref, wgf_ref, wxf_ref, aux_ref, ppre_ref, pstats_ref,
                    *, l_real):
    @pl.when(pl.program_id(1) == 0)
    def _init():
        pstats_ref[...] = jnp.zeros_like(pstats_ref)

    # conv1x1 + BN for both branches: BN scale folded into the weights, both
    # branches' (beta - scale*mean) folded into one per-channel shift (aux col 0).
    s = jnp.dot(wgf_ref[...], g_ref[0], preferred_element_type=jnp.float32)
    s = s + jnp.dot(wxf_ref[...], x_ref[0], preferred_element_type=jnp.float32)
    s = jnp.maximum(s + aux_ref[:, 0:1], 0.0)                     # (F_int, LT) f32

    # psi 1x1 conv (output width 1): VPU multiply + sublane reduce.
    p = jnp.sum(s * aux_ref[:, 1:2], axis=0, keepdims=True)       # (1, LT) f32

    if l_real is not None:  # zero-pad lanes must not pollute the psi statistics
        lt = p.shape[-1]
        col = pl.program_id(1) * lt + jax.lax.broadcasted_iota(jnp.int32, (1, lt), 1)
        p = jnp.where(col < l_real, p, 0.0)

    ppre_ref[0] = p.astype(ppre_ref.dtype)
    part = jnp.concatenate([jnp.sum(p, axis=1, keepdims=True),
                            jnp.sum(p * p, axis=1, keepdims=True)], axis=1)  # (1, 2)
    pstats_ref[...] += part[None]


# ---------------------------------------------------------------------------
# pass 3: out = x * sigmoid(scale_p * p + shift_p)   (pure elementwise map)
# ---------------------------------------------------------------------------
def _gate_kernel(x_ref, ppre_ref, aff_ref, out_ref):
    p = ppre_ref[0].astype(jnp.float32)                           # (1, LT)
    psi = jax.nn.sigmoid(p * aff_ref[0] + aff_ref[1])             # scalars from SMEM
    out_ref[0] = (x_ref[0] * psi.astype(x_ref.dtype)).astype(out_ref.dtype)


# ---------------------------------------------------------------------------
# wrapper
# ---------------------------------------------------------------------------
def attention_block(g_nchw, x_nchw, params, *, lane_tile_cap=None, io_dtype=None):
    """params = (wg, bg, gam_g, bet_g, wx, bx, gam_x, bet_x, wp, bp, gam_p, bet_p).

    wg: (F_int, F_g), wx: (F_int, F_l), wp: (1, F_int)  (Conv2d weight[:, :, 0, 0]).
    Conv biases feeding a training-mode BatchNorm cancel exactly, so they are unused.
    """
    (wg, bg, gam_g, bet_g, wx, bx, gam_x, bet_x, wp, bp, gam_p, bet_p) = params
    del bg, bx, bp  # absorbed (exactly) by the BN mean subtraction

    N, F_g, H, W = g_nchw.shape
    F_l = x_nchw.shape[1]
    F_int = wg.shape[0]
    L = H * W
    f32 = jnp.float32

    io_dtype = jnp.dtype(io_dtype) if io_dtype is not None else jnp.dtype(g_nchw.dtype)
    # bf16 MXU operands on the streaming path; exact f32 otherwise.
    mxu_dtype = jnp.dtype(jnp.bfloat16) if io_dtype == jnp.dtype(jnp.bfloat16) else f32
    iosz = io_dtype.itemsize

    # ---- generation-aware VMEM / lane-tile sizing -----------------------------------
    vmem_cap = _vmem_capacity_bytes()                 # 64 MiB on v7x, 128 MiB on v5e/v6e
    vmem_limit = min(int(0.75 * vmem_cap), 96 * 1024 * 1024)
    hw_cap = 1024 if vmem_cap <= 64 * 1024 * 1024 else 2048
    # rough per-lane working set of the heaviest pass (double-buffered I/O + f32 temps)
    per_lane = max(2 * (F_g + F_l + 1) * iosz + 4 * F_int * 4,
                   4 * F_l * iosz + 8)
    budget_cap = max(128, ((vmem_limit // 2) // per_lane) // 128 * 128)
    cap = min(hw_cap, budget_cap)
    if lane_tile_cap is not None:
        cap = min(cap, lane_tile_cap)
    cap = max(cap, 128)

    L_pad = ((L + 127) // 128) * 128                  # pad spatial axis once (zeros)
    LT = _pick_lane_tile(L_pad, cap)
    T = L_pad // LT
    cnt = jnp.float32(N * L)                          # real pixel count (pads excluded)

    # ---- NCHW kept native: reshape only (spatial axis -> lanes), optional zero pad ---
    g2 = g_nchw.reshape(N, F_g, L).astype(io_dtype)
    x2 = x_nchw.reshape(N, F_l, L).astype(io_dtype)
    if L_pad != L:
        pad = ((0, 0), (0, 0), (0, L_pad - L))
        g2 = jnp.pad(g2, pad)
        x2 = jnp.pad(x2, pad)

    wg32 = wg.astype(f32)
    wx32 = wx.astype(f32)
    wg_c = wg32.astype(mxu_dtype)
    wx_c = wx32.astype(mxu_dtype)

    def tile(c):       # per-pixel tile: batch n, all channels, LT lanes
        return pl.BlockSpec((1, c, LT), lambda n, t: (n, 0, t))

    def full(shape):   # small parameter block, resident for the whole grid
        return pl.BlockSpec(shape, lambda n, t: (0,) * len(shape))

    def batch_acc(shape):  # per-batch stats accumulator (revisited along T)
        return pl.BlockSpec((1,) + shape, lambda n, t: (n, 0, 0))

    stat_params = pltpu.CompilerParams(   # N parallel (megacore), T = accumulation
        dimension_semantics=("parallel", "arbitrary"), vmem_limit_bytes=vmem_limit)
    map_params = pltpu.CompilerParams(    # pass 3 is a pure map
        dimension_semantics=("parallel", "parallel"), vmem_limit_bytes=vmem_limit)

    # ---- pass 1: global statistics of the two conv outputs --------------------------
    stats = pl.pallas_call(
        _stats_kernel,
        grid=(N, T),
        in_specs=[tile(F_g), tile(F_l), full((F_int, F_g)), full((F_int, F_l))],
        out_specs=batch_acc((F_int, 4)),
        out_shape=jax.ShapeDtypeStruct((N, F_int, 4), f32),
        compiler_params=stat_params,
    )(g2, x2, wg_c, wx_c)
    stats = jnp.sum(stats, axis=0)                                 # (F_int, 4)

    # ---- fold BN into conv weights + one per-channel shift (tiny XLA ops) -----------
    # NOTE: var = E[x^2] - E[x]^2 in f32; fine for activation-scale data, consider a
    # compensated accumulation if |mean| >> std at very large N*H*W.
    mu_g = stats[:, 0] / cnt
    mu_x = stats[:, 2] / cnt
    var_g = stats[:, 1] / cnt - mu_g * mu_g
    var_x = stats[:, 3] / cnt - mu_x * mu_x
    scale_g = gam_g.astype(f32) * jax.lax.rsqrt(var_g + EPS)
    scale_x = gam_x.astype(f32) * jax.lax.rsqrt(var_x + EPS)
    wg_f = (wg32 * scale_g[:, None]).astype(mxu_dtype)
    wx_f = (wx32 * scale_x[:, None]).astype(mxu_dtype)
    shift = (bet_g.astype(f32) - scale_g * mu_g) + (bet_x.astype(f32) - scale_x * mu_x)
    aux = jnp.stack([shift, wp.astype(f32).reshape(F_int)], axis=1)  # (F_int, 2) f32

    # ---- pass 2: psi pre-activation + its statistics ---------------------------------
    psi_kernel = functools.partial(_psi_pre_kernel,
                                   l_real=L if L_pad != L else None)
    p_pre, p_stats = pl.pallas_call(
        psi_kernel,
        grid=(N, T),
        in_specs=[tile(F_g), tile(F_l), full((F_int, F_g)), full((F_int, F_l)),
                  full((F_int, 2))],
        out_specs=(tile(1), batch_acc((1, 2))),
        out_shape=(jax.ShapeDtypeStruct((N, 1, L_pad), io_dtype),
                   jax.ShapeDtypeStruct((N, 1, 2), f32)),
        compiler_params=stat_params,
    )(g2, x2, wg_f, wx_f, aux)
    p_stats = jnp.sum(p_stats, axis=0)                             # (1, 2)

    mu_p = p_stats[0, 0] / cnt
    var_p = p_stats[0, 1] / cnt - mu_p * mu_p
    scale_p = gam_p.astype(f32) * jax.lax.rsqrt(var_p + EPS)       # (1,)
    shift_p = bet_p.astype(f32) - scale_p * mu_p                   # (1,)
    psi_aff = jnp.concatenate([scale_p, shift_p])                  # (2,) -> SMEM

    # ---- pass 3: gate (lane-dense stores, parallel across TCs) ----------------------
    out2 = pl.pallas_call(
        _gate_kernel,
        grid=(N, T),
        in_specs=[tile(F_l), tile(1),
                  pl.BlockSpec(memory_space=pltpu.MemorySpace.SMEM)],
        out_specs=tile(F_l),
        out_shape=jax.ShapeDtypeStruct((N, F_l, L_pad), io_dtype),
        compiler_params=map_params,
    )(x2, p_pre, psi_aff)

    if L_pad != L:
        out2 = out2[:, :, :L]
    return out2.reshape(N, F_l, H, W)


# ---------------------------------------------------------------------------
# parameters / pure-JAX reference
# ---------------------------------------------------------------------------
def make_params(key, F_g, F_l, F_int):
    ks = jax.random.split(key, 10)
    f32 = jnp.float32
    wg = 0.2 * jax.random.normal(ks[0], (F_int, F_g), f32)
    bg = 0.1 * jax.random.normal(ks[1], (F_int,), f32)
    wx = 0.2 * jax.random.normal(ks[2], (F_int, F_l), f32)
    bx = 0.1 * jax.random.normal(ks[3], (F_int,), f32)
    wp = 0.2 * jax.random.normal(ks[4], (1, F_int), f32)
    bp = 0.1 * jax.random.normal(ks[5], (1,), f32)
    gam_g = 1.0 + 0.1 * jax.random.normal(ks[6], (F_int,), f32)
    bet_g = 0.1 * jax.random.normal(ks[7], (F_int,), f32)
    gam_x = 1.0 + 0.1 * jax.random.normal(ks[8], (F_int,), f32)
    bet_x = 0.1 * jax.random.normal(ks[9], (F_int,), f32)
    gam_p = jnp.array([1.3], f32)
    bet_p = jnp.array([-0.2], f32)
    return (wg, bg, gam_g, bet_g, wx, bx, gam_x, bet_x, wp, bp, gam_p, bet_p)


def reference(g, x, params):
    """Plain-JAX replica of the PyTorch forward (training-mode BatchNorm), NCHW."""
    (wg, bg, gam_g, bet_g, wx, bx, gam_x, bet_x, wp, bp, gam_p, bet_p) = params

    def conv1x1(v, w, b):
        return jnp.einsum('oc,nchw->nohw', w, v) + b[None, :, None, None]

    def bn(v, gamma, beta):
        mu = jnp.mean(v, axis=(0, 2, 3), keepdims=True)
        var = jnp.mean((v - mu) ** 2, axis=(0, 2, 3), keepdims=True)
        return (gamma[None, :, None, None] * (v - mu) / jnp.sqrt(var + EPS)
                + beta[None, :, None, None])

    g1 = bn(conv1x1(g, wg, bg), gam_g, bet_g)
    x1 = bn(conv1x1(x, wx, bx), gam_x, bet_x)
    s = jnp.maximum(g1 + x1, 0.0)
    psi = jax.nn.sigmoid(bn(conv1x1(s, wp, bp), gam_p, bet_p))
    return x * psi


if __name__ == "__main__":
    key = jax.random.PRNGKey(0)
    kg, kx, kp, kg2, kx2 = jax.random.split(key, 5)

    N, F_g, F_l, F_int, H, W = 2, 4, 4, 8, 16, 16
    g = jax.random.normal(kg, (N, F_g, H, W), jnp.float32)
    x = jax.random.normal(kx, (N, F_l, H, W), jnp.float32)
    params = make_params(kp, F_g, F_l, F_int)

    fwd = jax.jit(attention_block, static_argnames=("lane_tile_cap", "io_dtype"))

    # exact f32 path; lane_tile_cap=128 forces a multi-tile spatial grid here.
    out = jax.block_until_ready(fwd(g, x, params, lane_tile_cap=128))
    ref = reference(g, x, params)
    assert out.shape == x.shape, (out.shape, x.shape)
    err = float(jnp.max(jnp.abs(out - ref)))
    assert err < 1e-4, err

    # non-128-divisible spatial size (12x12 = 144 -> padded to 256, masked stats).
    Hb = Wb = 12
    gb = jax.random.normal(kg2, (N, F_g, Hb, Wb), jnp.float32)
    xb = jax.random.normal(kx2, (N, F_l, Hb, Wb), jnp.float32)
    out_b = jax.block_until_ready(fwd(gb, xb, params, lane_tile_cap=128))
    ref_b = reference(gb, xb, params)
    err_b = float(jnp.max(jnp.abs(out_b - ref_b)))
    assert err_b < 1e-4, err_b

    # bf16-streaming path: bf16 MXU operands, bf16 p_pre/output; stats stay f32.
    out_bf = jax.block_until_ready(
        fwd(g, x, params, lane_tile_cap=128, io_dtype=jnp.bfloat16))
    ref_bf = reference(g.astype(jnp.bfloat16).astype(jnp.float32),
                       x.astype(jnp.bfloat16).astype(jnp.float32), params)
    err_bf = float(jnp.max(jnp.abs(out_bf.astype(jnp.float32) - ref_bf)))
    assert err_bf < 1e-1, err_bf  # bf16 weight / p_pre / output rounding vs f32 ref

    print("KERNEL_OK")
</pallas_src>

<mosaic_0001>
module attributes {stable_mosaic.version = 11 : i64} {
  func.func @_stats_kernel(%arg0: i32, %arg1: i32, %arg2: memref<1x4x128xf32, #tpu.memory_space<vmem>>, %arg3: memref<1x4x128xf32, #tpu.memory_space<vmem>>, %arg4: memref<8x4xf32, #tpu.memory_space<vmem>>, %arg5: memref<8x4xf32, #tpu.memory_space<vmem>>, %arg6: memref<1x8x4xf32, #tpu.memory_space<vmem>>) attributes {dimension_semantics = [#tpu.dimension_semantics<parallel>, #tpu.dimension_semantics<arbitrary>], iteration_bounds = array<i64: 2, 2>, scalar_prefetch = 0 : i64, scratch_operands = 0 : i64, tpu.core_type = #tpu.core_type<tc>, window_params = [{transform_indices = @transform_0, window_bounds = array<i64: 1, 4, 128>}, {transform_indices = @transform_1, window_bounds = array<i64: 1, 4, 128>}, {pipeline_mode = #tpu.pipeline_mode<synchronous>, transform_indices = @transform_2, window_bounds = array<i64: 8, 4>}, {pipeline_mode = #tpu.pipeline_mode<synchronous>, transform_indices = @transform_3, window_bounds = array<i64: 8, 4>}, {transform_indices = @transform_4, window_bounds = array<i64: 1, 8, 4>}]} {
    %c0_i32 = arith.constant 0 : i32
    %0 = arith.cmpi eq, %arg1, %c0_i32 : i32
    %1 = arith.extui %0 : i1 to i32
    %c0_i32_0 = arith.constant 0 : i32
    %2 = arith.cmpi ne, %1, %c0_i32_0 : i32
    scf.if %2 {
      %cst_21 = arith.constant 0.000000e+00 : f32
      %26 = vector.broadcast %cst_21 : f32 to vector<1x8x4xf32>
      %c0_22 = arith.constant 0 : index
      %c0_23 = arith.constant 0 : index
      %c0_24 = arith.constant 0 : index
      %27 = vector.load %arg6[%c0_22, %c0_23, %c0_24] : memref<1x8x4xf32, #tpu.memory_space<vmem>>, vector<1x8x4xf32>
      tpu.vector_store %arg6[%c0_22, %c0_23, %c0_24], %26 {strides = array<i32>} : memref<1x8x4xf32, #tpu.memory_space<vmem>>, vector<1x8x4xf32>,
    } else {
    }
    %c0 = arith.constant 0 : index
    %c0_1 = arith.constant 0 : index
    %3 = vector.load %arg4[%c0, %c0_1] : memref<8x4xf32, #tpu.memory_space<vmem>>, vector<8x4xf32>
    %c0_2 = arith.constant 0 : index
    %c0_3 = arith.constant 0 : index
    %c0_4 = arith.constant 0 : index
    %4 = vector.load %arg2[%c0_2, %c0_3, %c0_4] : memref<1x4x128xf32, #tpu.memory_space<vmem>>, vector<1x4x128xf32>
    %5 = vector.shape_cast %4 : vector<1x4x128xf32> to vector<4x128xf32>
    %cst = arith.constant dense<0.000000e+00> : vector<8x128xf32>
    %6 = tpu.matmul %3, %5, %cst {dimension_numbers = #tpu.dot_dimension_numbers<[1], [0], [0], [1], [0, 0, 1, 1], [], []>} : vector<8x4xf32>, vector<4x128xf32>, vector<8x128xf32> -> vector<8x128xf32>
    %c0_5 = arith.constant 0 : index
    %c0_6 = arith.constant 0 : index
    %7 = vector.load %arg5[%c0_5, %c0_6] : memref<8x4xf32, #tpu.memory_space<vmem>>, vector<8x4xf32>
    %c0_7 = arith.constant 0 : index
    %c0_8 = arith.constant 0 : index
    %c0_9 = arith.constant 0 : index
    %8 = vector.load %arg3[%c0_7, %c0_8, %c0_9] : memref<1x4x128xf32, #tpu.memory_space<vmem>>, vector<1x4x128xf32>
    %9 = vector.shape_cast %8 : vector<1x4x128xf32> to vector<4x128xf32>
    %cst_10 = arith.constant dense<0.000000e+00> : vector<8x128xf32>
    %10 = tpu.matmul %7, %9, %cst_10 {dimension_numbers = #tpu.dot_dimension_numbers<[1], [0], [0], [1], [0, 0, 1, 1], [], []>} : vector<8x4xf32>, vector<4x128xf32>, vector<8x128xf32> -> vector<8x128xf32>
    %cst_11 = arith.constant dense<0.000000e+00> : vector<8xf32>
    %11 = vector.multi_reduction <add>, %6, %cst_11 [1] : vector<8x128xf32> to vector<8xf32>
    %12 = vector.shape_cast %11 : vector<8xf32> to vector<8x1xf32>
    %13 = arith.mulf %6, %6 : vector<8x128xf32>
    %cst_12 = arith.constant dense<0.000000e+00> : vector<8xf32>
    %14 = vector.multi_reduction <add>, %13, %cst_12 [1] : vector<8x128xf32> to vector<8xf32>
    %15 = vector.shape_cast %14 : vector<8xf32> to vector<8x1xf32>
    %cst_13 = arith.constant dense<0.000000e+00> : vector<8xf32>
    %16 = vector.multi_reduction <add>, %10, %cst_13 [1] : vector<8x128xf32> to vector<8xf32>
    %17 = vector.shape_cast %16 : vector<8xf32> to vector<8x1xf32>
    %18 = arith.mulf %10, %10 : vector<8x128xf32>
    %cst_14 = arith.constant dense<0.000000e+00> : vector<8xf32>
    %19 = vector.multi_reduction <add>, %18, %cst_14 [1] : vector<8x128xf32> to vector<8xf32>
    %20 = vector.shape_cast %19 : vector<8xf32> to vector<8x1xf32>
    %21 = tpu.concatenate %12, %15, %17, %20 in 1 : vector<8x1xf32>, vector<8x1xf32>, vector<8x1xf32>, vector<8x1xf32> -> vector<8x4xf32>
    %c0_15 = arith.constant 0 : index
    %c0_16 = arith.constant 0 : index
    %c0_17 = arith.constant 0 : index
    %22 = vector.load %arg6[%c0_15, %c0_16, %c0_17] : memref<1x8x4xf32, #tpu.memory_space<vmem>>, vector<1x8x4xf32>
    %23 = vector.shape_cast %21 : vector<8x4xf32> to vector<1x8x4xf32>
    %24 = arith.addf %22, %23 : vector<1x8x4xf32>
    %c0_18 = arith.constant 0 : index
    %c0_19 = arith.constant 0 : index
    %c0_20 = arith.constant 0 : index
    %25 = vector.load %arg6[%c0_18, %c0_19, %c0_20] : memref<1x8x4xf32, #tpu.memory_space<vmem>>, vector<1x8x4xf32>
    tpu.vector_store %arg6[%c0_18, %c0_19, %c0_20], %24 {strides = array<i32>} : memref<1x8x4xf32, #tpu.memory_space<vmem>>, vector<1x8x4xf32>,
    return
  }
  func.func @transform_0(%arg0: i32, %arg1: i32) -> (i32, i32, i32) {
    %c0_i32 = arith.constant 0 : i32
    %c0_i32_0 = arith.constant 0 : i32
    return %arg0, %c0_i32, %arg1 : i32, i32, i32
  }
  func.func @transform_1(%arg0: i32, %arg1: i32) -> (i32, i32, i32) {
    %c0_i32 = arith.constant 0 : i32
    %c0_i32_0 = arith.constant 0 : i32
    return %arg0, %c0_i32, %arg1 : i32, i32, i32
  }
  func.func @transform_2(%arg0: i32, %arg1: i32) -> (i32, i32) {
    %c0_i32 = arith.constant 0 : i32
    %c0_i32_0 = arith.constant 0 : i32
    %c0_i32_1 = arith.constant 0 : i32
    return %c0_i32, %c0_i32_0 : i32, i32
  }
  func.func @transform_3(%arg0: i32, %arg1: i32) -> (i32, i32) {
    %c0_i32 = arith.constant 0 : i32
    %c0_i32_0 = arith.constant 0 : i32
    %c0_i32_1 = arith.constant 0 : i32
    return %c0_i32, %c0_i32_0 : i32, i32
  }
  func.func @transform_4(%arg0: i32, %arg1: i32) -> (i32, i32, i32) {
    %c0_i32 = arith.constant 0 : i32
    %c0_i32_0 = arith.constant 0 : i32
    %c0_i32_1 = arith.constant 0 : i32
    return %arg0, %c0_i32, %c0_i32_0 : i32, i32, i32
  }
}

module attributes {stable_mosaic.version = 11 : i64} {
  func.func @_psi_pre_kernel(%arg0: i32, %arg1: i32, %arg2: memref<1x4x128xf32, #tpu.memory_space<vmem>>, %arg3: memref<1x4x128xf32, #tpu.memory_space<vmem>>, %arg4: memref<8x4xf32, #tpu.memory_space<vmem>>, %arg5: memref<8x4xf32, #tpu.memory_space<vmem>>, %arg6: memref<8x2xf32, #tpu.memory_space<vmem>>, %arg7: memref<1x1x128xf32, #tpu.memory_space<vmem>>, %arg8: memref<1x1x2xf32, #tpu.memory_space<vmem>>) attributes {dimension_semantics = [#tpu.dimension_semantics<parallel>, #tpu.dimension_semantics<arbitrary>], iteration_bounds = array<i64: 2, 2>, scalar_prefetch = 0 : i64, scratch_operands = 0 : i64, tpu.core_type = #tpu.core_type<tc>, window_params = [{transform_indices = @transform_0, window_bounds = array<i64: 1, 4, 128>}, {transform_indices = @transform_1, window_bounds = array<i64: 1, 4, 128>}, {pipeline_mode = #tpu.pipeline_mode<synchronous>, transform_indices = @transform_2, window_bounds = array<i64: 8, 4>}, {pipeline_mode = #tpu.pipeline_mode<synchronous>, transform_indices = @transform_3, window_bounds = array<i64: 8, 4>}, {pipeline_mode = #tpu.pipeline_mode<synchronous>, transform_indices = @transform_4, window_bounds = array<i64: 8, 2>}, {transform_indices = @transform_5, window_bounds = array<i64: 1, 1, 128>}, {transform_indices = @transform_6, window_bounds = array<i64: 1, 1, 2>}]} {
    %c0_i32 = arith.constant 0 : i32
    %0 = arith.cmpi eq, %arg1, %c0_i32 : i32
    %1 = arith.extui %0 : i1 to i32
    %c0_i32_0 = arith.constant 0 : i32
    %2 = arith.cmpi ne, %1, %c0_i32_0 : i32
    scf.if %2 {
      %cst_27 = arith.constant 0.000000e+00 : f32
      %35 = vector.broadcast %cst_27 : f32 to vector<1x1x2xf32>
      %c0_28 = arith.constant 0 : index
      %c0_29 = arith.constant 0 : index
      %c0_30 = arith.constant 0 : index
      %36 = vector.load %arg8[%c0_28, %c0_29, %c0_30] : memref<1x1x2xf32, #tpu.memory_space<vmem>>, vector<1x1x2xf32>
      tpu.vector_store %arg8[%c0_28, %c0_29, %c0_30], %35 {strides = array<i32>} : memref<1x1x2xf32, #tpu.memory_space<vmem>>, vector<1x1x2xf32>,
    } else {
    }
    %c0 = arith.constant 0 : index
    %c0_1 = arith.constant 0 : index
    %3 = vector.load %arg4[%c0, %c0_1] : memref<8x4xf32, #tpu.memory_space<vmem>>, vector<8x4xf32>
    %c0_2 = arith.constant 0 : index
    %c0_3 = arith.constant 0 : index
    %c0_4 = arith.constant 0 : index
    %4 = vector.load %arg2[%c0_2, %c0_3, %c0_4] : memref<1x4x128xf32, #tpu.memory_space<vmem>>, vector<1x4x128xf32>
    %5 = vector.shape_cast %4 : vector<1x4x128xf32> to vector<4x128xf32>
    %cst = arith.constant dense<0.000000e+00> : vector<8x128xf32>
    %6 = tpu.matmul %3, %5, %cst {dimension_numbers = #tpu.dot_dimension_numbers<[1], [0], [0], [1], [0, 0, 1, 1], [], []>} : vector<8x4xf32>, vector<4x128xf32>, vector<8x128xf32> -> vector<8x128xf32>
    %c0_5 = arith.constant 0 : index
    %c0_6 = arith.constant 0 : index
    %7 = vector.load %arg5[%c0_5, %c0_6] : memref<8x4xf32, #tpu.memory_space<vmem>>, vector<8x4xf32>
    %c0_7 = arith.constant 0 : index
    %c0_8 = arith.constant 0 : index
    %c0_9 = arith.constant 0 : index
    %8 = vector.load %arg3[%c0_7, %c0_8, %c0_9] : memref<1x4x128xf32, #tpu.memory_space<vmem>>, vector<1x4x128xf32>
    %9 = vector.shape_cast %8 : vector<1x4x128xf32> to vector<4x128xf32>
    %cst_10 = arith.constant dense<0.000000e+00> : vector<8x128xf32>
    %10 = tpu.matmul %7, %9, %cst_10 {dimension_numbers = #tpu.dot_dimension_numbers<[1], [0], [0], [1], [0, 0, 1, 1], [], []>} : vector<8x4xf32>, vector<4x128xf32>, vector<8x128xf32> -> vector<8x128xf32>
    %11 = arith.addf %6, %10 : vector<8x128xf32>
    %c0_11 = arith.constant 0 : index
    %c0_12 = arith.constant 0 : index
    %12 = vector.load %arg6[%c0_11, %c0_12] : memref<8x2xf32, #tpu.memory_space<vmem>>, vector<8x1xf32>
    %13 = vector.broadcast %12 : vector<8x1xf32> to vector<8x128xf32>
    %14 = arith.addf %11, %13 : vector<8x128xf32>
    %cst_13 = arith.constant 0.000000e+00 : f32
    %15 = vector.broadcast %cst_13 : f32 to vector<8x128xf32>
    %16 = arith.maximumf %14, %15 : vector<8x128xf32>
    %c0_14 = arith.constant 0 : index
    %c1 = arith.constant 1 : index
    %17 = vector.load %arg6[%c0_14, %c1] : memref<8x2xf32, #tpu.memory_space<vmem>>, vector<8x1xf32>
    %18 = vector.broadcast %17 : vector<8x1xf32> to vector<8x128xf32>
    %19 = arith.mulf %16, %18 : vector<8x128xf32>
    %cst_15 = arith.constant dense<0.000000e+00> : vector<128xf32>
    %20 = vector.multi_reduction <add>, %19, %cst_15 [0] : vector<8x128xf32> to vector<128xf32>
    %21 = vector.shape_cast %20 : vector<128xf32> to vector<1x128xf32>
    %c0_16 = arith.constant 0 : index
    %c0_17 = arith.constant 0 : index
    %c0_18 = arith.constant 0 : index
    %22 = vector.load %arg7[%c0_16, %c0_17, %c0_18] : memref<1x1x128xf32, #tpu.memory_space<vmem>>, vector<1x1x128xf32>
    %23 = vector.shape_cast %22 : vector<1x1x128xf32> to vector<1x128xf32>
    %24 = vector.shape_cast %21 : vector<1x128xf32> to vector<1x1x128xf32>
    tpu.vector_store %arg7[%c0_16, %c0_17, %c0_18], %24 {strides = array<i32>} : memref<1x1x128xf32, #tpu.memory_space<vmem>>, vector<1x1x128xf32>,
    %cst_19 = arith.constant dense<0.000000e+00> : vector<1xf32>
    %25 = vector.multi_reduction <add>, %21, %cst_19 [1] : vector<1x128xf32> to vector<1xf32>
    %26 = vector.shape_cast %25 : vector<1xf32> to vector<1x1xf32>
    %27 = arith.mulf %21, %21 : vector<1x128xf32>
    %cst_20 = arith.constant dense<0.000000e+00> : vector<1xf32>
    %28 = vector.multi_reduction <add>, %27, %cst_20 [1] : vector<1x128xf32> to vector<1xf32>
    %29 = vector.shape_cast %28 : vector<1xf32> to vector<1x1xf32>
    %30 = tpu.concatenate %26, %29 in 1 : vector<1x1xf32>, vector<1x1xf32> -> vector<1x2xf32>
    %c0_21 = arith.constant 0 : index
    %c0_22 = arith.constant 0 : index
    %c0_23 = arith.constant 0 : index
    %31 = vector.load %arg8[%c0_21, %c0_22, %c0_23] : memref<1x1x2xf32, #tpu.memory_space<vmem>>, vector<1x1x2xf32>
    %32 = vector.shape_cast %30 : vector<1x2xf32> to vector<1x1x2xf32>
    %33 = arith.addf %31, %32 : vector<1x1x2xf32>
    %c0_24 = arith.constant 0 : index
    %c0_25 = arith.constant 0 : index
    %c0_26 = arith.constant 0 : index
    %34 = vector.load %arg8[%c0_24, %c0_25, %c0_26] : memref<1x1x2xf32, #tpu.memory_space<vmem>>, vector<1x1x2xf32>
    tpu.vector_store %arg8[%c0_24, %c0_25, %c0_26], %33 {strides = array<i32>} : memref<1x1x2xf32, #tpu.memory_space<vmem>>, vector<1x1x2xf32>,
    return
  }
  func.func @transform_0(%arg0: i32, %arg1: i32) -> (i32, i32, i32) {
    %c0_i32 = arith.constant 0 : i32
    %c0_i32_0 = arith.constant 0 : i32
    return %arg0, %c0_i32, %arg1 : i32, i32, i32
  }
  func.func @transform_1(%arg0: i32, %arg1: i32) -> (i32, i32, i32) {
    %c0_i32 = arith.constant 0 : i32
    %c0_i32_0 = arith.constant 0 : i32
    return %arg0, %c0_i32, %arg1 : i32, i32, i32
  }
  func.func @transform_2(%arg0: i32, %arg1: i32) -> (i32, i32) {
    %c0_i32 = arith.constant 0 : i32
    %c0_i32_0 = arith.constant 0 : i32
    %c0_i32_1 = arith.constant 0 : i32
    return %c0_i32, %c0_i32_0 : i32, i32
  }
  func.func @transform_3(%arg0: i32, %arg1: i32) -> (i32, i32) {
    %c0_i32 = arith.constant 0 : i32
    %c0_i32_0 = arith.constant 0 : i32
    %c0_i32_1 = arith.constant 0 : i32
    return %c0_i32, %c0_i32_0 : i32, i32
  }
  func.func @transform_4(%arg0: i32, %arg1: i32) -> (i32, i32) {
    %c0_i32 = arith.constant 0 : i32
    %c0_i32_0 = arith.constant 0 : i32
    %c0_i32_1 = arith.constant 0 : i32
    return %c0_i32, %c0_i32_0 : i32, i32
  }
  func.func @transform_5(%arg0: i32, %arg1: i32) -> (i32, i32, i32) {
    %c0_i32 = arith.constant 0 : i32
    %c0_i32_0 = arith.constant 0 : i32
    return %arg0, %c0_i32, %arg1 : i32, i32, i32
  }
  func.func @transform_6(%arg0: i32, %arg1: i32) -> (i32, i32, i32) {
    %c0_i32 = arith.constant 0 : i32
    %c0_i32_0 = arith.constant 0 : i32
    %c0_i32_1 = arith.constant 0 : i32
    return %arg0, %c0_i32, %c0_i32_0 : i32, i32, i32
  }
}

module attributes {stable_mosaic.version = 11 : i64} {
  func.func @_gate_kernel(%arg0: i32, %arg1: i32, %arg2: memref<1x4x128xf32, #tpu.memory_space<vmem>>, %arg3: memref<1x1x128xf32, #tpu.memory_space<vmem>>, %arg4: memref<2xf32, #tpu.memory_space<smem>>, %arg5: memref<1x4x128xf32, #tpu.memory_space<vmem>>) attributes {dimension_semantics = [#tpu.dimension_semantics<parallel>, #tpu.dimension_semantics<parallel>], iteration_bounds = array<i64: 2, 2>, scalar_prefetch = 0 : i64, scratch_operands = 0 : i64, tpu.core_type = #tpu.core_type<tc>, window_params = [{transform_indices = @transform_0, window_bounds = array<i64: 1, 4, 128>}, {transform_indices = @transform_1, window_bounds = array<i64: 1, 1, 128>}, {transform_indices = @transform_2, window_bounds = array<i64: 2>}, {transform_indices = @transform_3, window_bounds = array<i64: 1, 4, 128>}]} {
    %c0 = arith.constant 0 : index
    %c0_0 = arith.constant 0 : index
    %c0_1 = arith.constant 0 : index
    %0 = vector.load %arg3[%c0, %c0_0, %c0_1] : memref<1x1x128xf32, #tpu.memory_space<vmem>>, vector<1x1x128xf32>
    %1 = vector.shape_cast %0 : vector<1x1x128xf32> to vector<1x128xf32>
    %c0_2 = arith.constant 0 : index
    %2 = memref.load %arg4[%c0_2] : memref<2xf32, #tpu.memory_space<smem>>
    %3 = vector.broadcast %2 : f32 to vector<1x128xf32>
    %4 = arith.mulf %1, %3 : vector<1x128xf32>
    %c1 = arith.constant 1 : index
    %5 = memref.load %arg4[%c1] : memref<2xf32, #tpu.memory_space<smem>>
    %6 = vector.broadcast %5 : f32 to vector<1x128xf32>
    %7 = arith.addf %4, %6 : vector<1x128xf32>
    %8 = arith.negf %7 : vector<1x128xf32>
    %9 = math.exp %8 : vector<1x128xf32>
    %cst = arith.constant 1.000000e+00 : f32
    %10 = vector.broadcast %cst : f32 to vector<1x128xf32>
    %11 = arith.addf %10, %9 : vector<1x128xf32>
    %12 = arith.divf %10, %11 : vector<1x128xf32>
    %c0_3 = arith.constant 0 : index
    %c0_4 = arith.constant 0 : index
    %c0_5 = arith.constant 0 : index
    %13 = vector.load %arg2[%c0_3, %c0_4, %c0_5] : memref<1x4x128xf32, #tpu.memory_space<vmem>>, vector<1x4x128xf32>
    %14 = vector.shape_cast %13 : vector<1x4x128xf32> to vector<4x128xf32>
    %15 = vector.broadcast %12 : vector<1x128xf32> to vector<4x128xf32>
    %16 = arith.mulf %14, %15 : vector<4x128xf32>
    %c0_6 = arith.constant 0 : index
    %c0_7 = arith.constant 0 : index
    %c0_8 = arith.constant 0 : index
    %17 = vector.load %arg5[%c0_6, %c0_7, %c0_8] : memref<1x4x128xf32, #tpu.memory_space<vmem>>, vector<1x4x128xf32>
    %18 = vector.shape_cast %17 : vector<1x4x128xf32> to vector<4x128xf32>
    %19 = vector.shape_cast %16 : vector<4x128xf32> to vector<1x4x128xf32>
    tpu.vector_store %arg5[%c0_6, %c0_7, %c0_8], %19 {strides = array<i32>} : memref<1x4x128xf32, #tpu.memory_space<vmem>>, vector<1x4x128xf32>,
    return
  }
  func.func @transform_0(%arg0: i32, %arg1: i32) -> (i32, i32, i32) {
    %c0_i32 = arith.constant 0 : i32
    %c0_i32_0 = arith.constant 0 : i32
    return %arg0, %c0_i32, %arg1 : i32, i32, i32
  }
  func.func @transform_1(%arg0: i32, %arg1: i32) -> (i32, i32, i32) {
    %c0_i32 = arith.constant 0 : i32
    %c0_i32_0 = arith.constant 0 : i32
    return %arg0, %c0_i32, %arg1 : i32, i32, i32
  }
  func.func @transform_2(%arg0: i32, %arg1: i32) -> i32 {
    %c0_i32 = arith.constant 0 : i32
    %c0_i32_0 = arith.constant 0 : i32
    return %c0_i32 : i32
  }
  func.func @transform_3(%arg0: i32, %arg1: i32) -> (i32, i32, i32) {
    %c0_i32 = arith.constant 0 : i32
    %c0_i32_0 = arith.constant 0 : i32
    return %arg0, %c0_i32, %arg1 : i32, i32, i32
  }
}

</mosaic_0001>

<llo_original>
// kernel: attention_block.3
$region0: #{attention_block.3}
  #allocation0 [shape = 'u32[]', space=smem, size = 0x4, offset = 0x4, fixed_abs, tag = 'smem constant byte address 0x4 - core index']
  #allocation1 [shape = 'u32[144,128]{1,0:T(1,128)}', space=vmem, size = 0x12000, scoped, tag = 'internal scratch']
  %s0 = inlined_call_operand.vmem [shape: f32[2,4,256], index: 0, kind: input, shape index: {}]
  %s1 = inlined_call_operand.vmem [shape: f32[2,4,256], index: 1, kind: input, shape index: {}]
  %s2 = inlined_call_operand.vmem [shape: f32[8,4], index: 2, kind: input, shape index: {}]
  %s3 = inlined_call_operand.vmem [shape: f32[8,4], index: 3, kind: input, shape index: {}]
  %s4 = inlined_call_operand.vmem [shape: f32[2,8,4], index: 4, kind: output, shape index: {}]
  %s5 = sld [smem:[#allocation0]]
  $region53: #{attention_block.3} parent=0
    _
  %s7 = ssub.s32 1, %s5
  %s8 = scalar_select 0, %s7, %s5
  loop: start=0, step=1, limit=6
  $region2: #{attention_block.3} parent=0 // loop_pre_header
    _
  $region3: #{attention_block.3} parent=0 // loop_header
    %s10 = sphi 0, %s14
    %p11 = scmp.ge.s32.totalorder %s10, 6
    %s17 = sphi 0, %s29
    %s18 = sphi 0, %s25
    %s19 = sphi 0, %s17
    %s20 = sphi 0, %s18
    %s21 = sphi 0, %s19
    %s22 = sphi 0, %s20
    %s34 = sphi 0, %s36
    %s37 = sphi 0, %s34
    %s38 = sphi 0, %s37
    %s54 = sphi 0, %s38
    %s62 = sphi 0, %s64
    %s65 = sphi 0, %s62
    %s66 = sphi 0, %s65
    %s82 = sphi 0, %s66
    %s86 = sphi 0, %s86
    %s88 = sphi 0, %s86
    %s89 = sphi 0, %s88
    %s103 = sphi 0, %s89
    %s107 = sphi 0, %s107
    %s109 = sphi 0, %s107
    %s110 = sphi 0, %s109
    %s124 = sphi 0, %s110
    %s130 = sphi 0, %s132
    %s133 = sphi 0, %s130
    %s134 = sphi 0, %s133
    %s150 = sphi 0, %s134
  $region4: #{attention_block.3} parent=0 // loop_header_branch
    %13 = sbr.rel (%p11) target = $region8
  $region5: #{attention_block.3} parent=0 // loop_body
    %s15 = ssub.s32 %s10, 1
    %s16 = ssub.s32 %s10, 2
    %s23 = sadd.s32 1, %s18
    %p24 = scmp.ge.s32.totalorder %s23, 2
    %s25 = scalar_select %p24, 0, %s23
    %s26 = sadd.s32 1, %s17
    %s27 = scalar_select %p24, %s26, %s17
    %p28 = scmp.ge.s32.totalorder %s27, 2
    %s29 = scalar_select %p28, 0, %s27
    %s30 = ssub.s32 %s17, %s29
    %s31 = ssub.s32 %s18, %s25
    %s32 = sor.u32 %s30, %s31
    %p33 = scmp.eq.s32.totalorder %s32, 0
    %s35 = sadd.s32 %s34, 1
    %s36 = scalar_select %p33, %s34, %s35
    %p39 = pneg %p33
    %p40 = scmp.eq.s32.totalorder %s10, 3
    %p41 = por %p39, %p40
    %p42 = scmp.ne.s32.totalorder %s34, %s37
    %p43 = scmp.eq.s32.totalorder %s10, 0
    %p44 = por %p42, %p43
    %p45 = scmp.ne.s32.totalorder %s34, %s37
    %p46 = scmp.eq.s32.totalorder %s15, 3
    %p47 = por %p45, %p46
    %p48 = scmp.ne.s32.totalorder %s37, %s38
    %p49 = scmp.eq.s32.totalorder %s15, 0
    %p50 = por %p48, %p49
    %p51 = scmp.ne.s32.totalorder %s37, %s38
    %p52 = scmp.eq.s32.totalorder %s16, 3
    %p53 = por %p51, %p52
    %p55 = scmp.ne.s32.totalorder %s38, %s54
    %p56 = scmp.eq.s32.totalorder %s16, 0
    %p57 = por %p55, %p56
    %s58 = ssub.s32 %s17, %s29
    %s59 = ssub.s32 %s18, %s25
    %s60 = sor.u32 %s58, %s59
    %p61 = scmp.eq.s32.totalorder %s60, 0
    %s63 = sadd.s32 %s62, 1
    %s64 = scalar_select %p61, %s62, %s63
    %p67 = pneg %p61
    %p68 = scmp.eq.s32.totalorder %s10, 3
    %p69 = por %p67, %p68
    %p70 = scmp.ne.s32.totalorder %s62, %s65
    %p71 = scmp.eq.s32.totalorder %s10, 0
    %p72 = por %p70, %p71
    %p73 = scmp.ne.s32.totalorder %s62, %s65
    %p74 = scmp.eq.s32.totalorder %s15, 3
    %p75 = por %p73, %p74
    %p76 = scmp.ne.s32.totalorder %s65, %s66
    %p77 = scmp.eq.s32.totalorder %s15, 0
    %p78 = por %p76, %p77
    %p79 = scmp.ne.s32.totalorder %s65, %s66
    %p80 = scmp.eq.s32.totalorder %s16, 3
    %p81 = por %p79, %p80
    %p83 = scmp.ne.s32.totalorder %s66, %s82
    %p84 = scmp.eq.s32.totalorder %s16, 0
    %p85 = por %p83, %p84
    %s87 = sadd.s32 %s86, 1
    %p90 = scmp.eq.s32.totalorder %s10, 3
    %p91 = scmp.ne.s32.totalorder %s86, %s88
    %p92 = scmp.eq.s32.totalorder %s10, 0
    %p93 = por %p91, %p92
    %p94 = scmp.ne.s32.totalorder %s86, %s88
    %p95 = scmp.eq.s32.totalorder %s15, 3
    %p96 = por %p94, %p95
    %p97 = scmp.ne.s32.totalorder %s88, %s89
    %p98 = scmp.eq.s32.totalorder %s15, 0
    %p99 = por %p97, %p98
    %p100 = scmp.ne.s32.totalorder %s88, %s89
    %p101 = scmp.eq.s32.totalorder %s16, 3
    %p102 = por %p100, %p101
    %p104 = scmp.ne.s32.totalorder %s89, %s103
    %p105 = scmp.eq.s32.totalorder %s16, 0
    %p106 = por %p104, %p105
    %s108 = sadd.s32 %s107, 1
    %p111 = scmp.eq.s32.totalorder %s10, 3
    %p112 = scmp.ne.s32.totalorder %s107, %s109
    %p113 = scmp.eq.s32.totalorder %s10, 0
    %p114 = por %p112, %p113
    %p115 = scmp.ne.s32.totalorder %s107, %s109
    %p116 = scmp.eq.s32.totalorder %s15, 3
    %p117 = por %p115, %p116
    %p118 = scmp.ne.s32.totalorder %s109, %s110
    %p119 = scmp.eq.s32.totalorder %s15, 0
    %p120 = por %p118, %p119
    %p121 = scmp.ne.s32.totalorder %s109, %s110
    %p122 = scmp.eq.s32.totalorder %s16, 3
    %p123 = por %p121, %p122
    %p125 = scmp.ne.s32.totalorder %s110, %s124
    %p126 = scmp.eq.s32.totalorder %s16, 0
    %p127 = por %p125, %p126
    %s128 = ssub.s32 %s17, %s29
    %p129 = scmp.eq.s32.totalorder %s128, 0
    %s131 = sadd.s32 %s130, 1
    %s132 = scalar_select %p129, %s130, %s131
    %p135 = pneg %p129
    %p136 = scmp.eq.s32.totalorder %s10, 3
    %p137 = por %p135, %p136
    %p138 = scmp.ne.s32.totalorder %s130, %s133
    %p139 = scmp.eq.s32.totalorder %s10, 0
    %p140 = por %p138, %p139
    %p141 = scmp.ne.s32.totalorder %s130, %s133
    %p142 = scmp.eq.s32.totalorder %s15, 3
    %p143 = por %p141, %p142
    %p144 = scmp.ne.s32.totalorder %s133, %s134
    %p145 = scmp.eq.s32.totalorder %s15, 0
    %p146 = por %p144, %p145
    %p147 = scmp.ne.s32.totalorder %s133, %s134
    %p148 = scmp.eq.s32.totalorder %s16, 3
    %p149 = por %p147, %p148
    %p151 = scmp.ne.s32.totalorder %s134, %s150
    %p152 = scmp.eq.s32.totalorder %s16, 0
    %p153 = por %p151, %p152
    %p154 = scmp.le.s32.totalorder 1, %s10
    %p155 = scmp.lt.s32.totalorder %s10, 5
    %p156 = pnand %p154, %p155
    %p157 = pneg %p156
    // Predicated region
    $region9: #{attention_block.3} parent=5 // pred_check
      _
    $region10: #{attention_block.3} parent=5 // pred_check_branch
      %159 = sbr.rel (%p156) target = $region12
    $region11: #{attention_block.3} parent=5 // pred_region
      %s160 = ssub.s32 %s10, 1
      // Predicated region
      $region13: #{attention_block.3} parent=11 // pred_check
        %p161 = pneg %p99
      $region14: #{attention_block.3} parent=11 // pred_check_branch
        %163 = sbr.rel (%p161) target = $region16
      $region15: #{attention_block.3} parent=11 // pred_region
        _
      $region16: #{attention_block.3} parent=11 // pred_fallthru
        _
      // Predicated region
      $region17: #{attention_block.3} parent=11 // pred_check
        %p164 = pneg %p120
      $region18: #{attention_block.3} parent=11 // pred_check_branch
        %166 = sbr.rel (%p164) target = $region20
      $region19: #{attention_block.3} parent=11 // pred_region
        _
      $region20: #{attention_block.3} parent=11 // pred_fallthru
        _
    $region12: #{attention_block.3} parent=5 // pred_fallthru
      _
    %p167 = scmp.lt.s32.totalorder %s10, 4
    // Predicated region
    $region21: #{attention_block.3} parent=5 // pred_check
      %p168 = pneg %p167
    $region22: #{attention_block.3} parent=5 // pred_check_branch
      %170 = sbr.rel (%p168) target = $region24
    $region23: #{attention_block.3} parent=5 // pred_region
      // Predicated region
      $region25: #{attention_block.3} parent=23 // pred_check
        %p171 = pneg %p44
      $region26: #{attention_block.3} parent=23 // pred_check_branch
        %173 = sbr.rel (%p171) target = $region28
      $region27: #{attention_block.3} parent=23 // pred_region
        %p174 = scmp.lt.s32.totalorder %s17, 1
        %s175 = scalar_select %p174, %s17, 1
        %p176 = scmp.lt.s32.totalorder %s18, 1
        %s177 = scalar_select %p176, %s18, 1
        %s178 = smul.addr %s175, 2
        %s179 = sadd.s32 %s177, %s178
        %s180 = smul.addr %s179, 4
        %s181 = scalar_lea.vmem %s0, %s180
      $region28: #{attention_block.3} parent=23 // pred_fallthru
        _
      // Predicated region
      $region29: #{attention_block.3} parent=23 // pred_check
        %p182 = pneg %p72
      $region30: #{attention_block.3} parent=23 // pred_check_branch
        %184 = sbr.rel (%p182) target = $region32
      $region31: #{attention_block.3} parent=23 // pred_region
        %p185 = scmp.lt.s32.totalorder %s17, 1
        %s186 = scalar_select %p185, %s17, 1
        %p187 = scmp.lt.s32.totalorder %s18, 1
        %s188 = scalar_select %p187, %s18, 1
        %s189 = smul.addr %s186, 2
        %s190 = sadd.s32 %s188, %s189
        %s191 = smul.addr %s190, 4
        %s192 = scalar_lea.vmem %s1, %s191
      $region32: #{attention_block.3} parent=23 // pred_fallthru
        _
    $region24: #{attention_block.3} parent=5 // pred_fallthru
      _
    %p193 = scmp.le.s32.totalorder 1, %s10
    %p194 = scmp.lt.s32.totalorder %s10, 5
    %p195 = pnand %p193, %p194
    %p196 = pneg %p195
    // Predicated region
    $region33: #{attention_block.3} parent=5 // pred_check
      _
    $region34: #{attention_block.3} parent=5 // pred_check_branch
      %198 = sbr.rel (%p195) target = $region36
    $region35: #{attention_block.3} parent=5 // pred_region
      %s199 = ssub.s32 %s10, 1
      %p200 = scmp.lt.s32.totalorder %s19, 1
      %s201 = scalar_select %p200, %s19, 1
      %p202 = scmp.lt.s32.totalorder %s20, 1
      %s203 = scalar_select %p202, %s20, 1
      %s204 = smul.addr %s201, 2
      %s205 = sadd.s32 %s203, %s204
      %s206 = smul.addr %s205, 4
      %s207 = scalar_lea.vmem %s0, %s206
      %p208 = pneg %p50
      %p209 = pneg %p47
      %p210 = scmp.lt.s32.totalorder %s19, 1
      %s211 = scalar_select %p210, %s19, 1
      %p212 = scmp.lt.s32.totalorder %s20, 1
      %s213 = scalar_select %p212, %s20, 1
      %s214 = smul.addr %s211, 2
      %s215 = sadd.s32 %s213, %s214
      %s216 = smul.addr %s215, 4
      %s217 = scalar_lea.vmem %s1, %s216
      %p218 = pneg %p78
      %p219 = pneg %p75
      %p220 = pneg %p99
      %p221 = pneg %p96
      %p222 = pneg %p120
      %p223 = pneg %p117
      %p224 = pneg %p146
      %p225 = pneg %p143
      %p226 = scmp.lt.s32.totalorder %s19, 1
      %s227 = scalar_select %p226, %s19, 1
      %s228 = smul.addr %s227, 8
      %s229 = scalar_lea.vmem %s4, %s228
      %p230 = scmp.lt.s32.totalorder %s19, 1
      %s231 = scalar_select %p230, %s19, 1
      %p232 = scmp.lt.s32.totalorder %s20, 1
      %s233 = scalar_select %p232, %s20, 1
      %s234 = smul.addr %s231, 2
      %s235 = sadd.s32 %s233, %s234
      %s236 = smul.addr %s235, 4
      %s237 = scalar_lea.vmem %s0, %s236
      %p238 = scmp.lt.s32.totalorder %s19, 1
      %s239 = scalar_select %p238, %s19, 1
      %p240 = scmp.lt.s32.totalorder %s20, 1
      %s241 = scalar_select %p240, %s20, 1
      %s242 = smul.addr %s239, 2
      %s243 = sadd.s32 %s241, %s242
      %s244 = smul.addr %s243, 4
      %s245 = scalar_lea.vmem %s1, %s244
      %p246 = scmp.lt.s32.totalorder %s19, 1
      %s247 = scalar_select %p246, %s19, 1
      %s248 = smul.addr %s247, 8
      %s249 = scalar_lea.vmem %s4, %s248
      %p250 = scmp.eq.s32.totalorder %s20, 0
      // Predicated region
      $region37: #{attention_block.3} parent=35 // pred_check
        %p251 = pneg %p250
      $region38: #{attention_block.3} parent=35 // pred_check_branch
        %253 = sbr.rel (%p251) target = $region40
      $region39: #{attention_block.3} parent=35 // pred_region
        %vm254 = vcmask 31744
        %255 = vst.msk [vmem:[%s249] sm:$0xff] %vm254, 0.0
      $region40: #{attention_block.3} parent=35 // pred_fallthru
        _
      %v256 = vld [vmem:[%s2] sm:$0xff]
      %v257 = vld [vmem:[%s237] sm:$0xf]
      %vm258 = vcmask 31744
      %v260 = vsel %vm258, %v256, 0
      %vm262 = vcmask 1043456
      %v264 = vsel %vm262, %v257, 0
      %266 = vmatprep.subr.mxu0 0.0
      %267 = vmatpush1.msra.mxu0 %v264
      %268 = vmatprep.subr.mxu0 0.0
      %269 = vmatpush1.msra.mxu0 0.0
      %270 = vmatprep.subr.mxu0 0.0
      %271 = vmatpush1.msra.mxu0 0.0
      %272 = vmatprep.subr.mxu0 0.0
      %273 = vmatpush1.msra.mxu0 0.0
      %274 = vmatprep.subr.mxu0 0.0
      %275 = vmatpush1.msra.mxu0 0.0
      %276 = vmatprep.subr.mxu0 0.0
      %277 = vmatpush1.msra.mxu0 0.0
      %278 = vmatprep.subr.mxu0 0.0
      %279 = vmatpush1.msra.mxu0 0.0
      %280 = vmatprep.subr.mxu0 0.0
      %281 = vmatpush1.msra.mxu0 0.0
      %282 = vmatprep.subr.mxu0 0.0
      %283 = vmatpush1.msra.mxu0 0.0
      %284 = vmatprep.subr.mxu0 0.0
      %285 = vmatpush1.msra.mxu0 0.0
      %286 = vmatprep.subr.mxu0 0.0
      %287 = vmatpush1.msra.mxu0 0.0
      %288 = vmatprep.subr.mxu0 0.0
      %289 = vmatpush1.msra.mxu0 0.0
      %290 = vmatprep.subr.mxu0 0.0
      %291 = vmatpush1.msra.mxu0 0.0
      %292 = vmatprep.subr.mxu0 0.0
      %293 = vmatpush1.msra.mxu0 0.0
      %294 = vmatprep.subr.mxu0 0.0
      %295 = vmatpush1.msra.mxu0 0.0
      %296 = vmatprep.subr.mxu0 0.0
      %297 = vmatpush1.msra.mxu0 0.0
      %298 = vmatprep.subr.mxu0 0.0
      %299 = vmatpush1.msra.mxu0 0.0
      %300 = vmatprep.subr.mxu0 0.0
      %301 = vmatpush1.msra.mxu0 0.0
      %302 = vmatprep.subr.mxu0 0.0
      %303 = vmatpush1.msra.mxu0 0.0
      %304 = vmatprep.subr.mxu0 0.0
      %305 = vmatpush1.msra.mxu0 0.0
      %306 = vmatprep.subr.mxu0 0.0
      %307 = vmatpush1.msra.mxu0 0.0
      %308 = vmatprep.subr.mxu0 0.0
      %309 = vmatpush1.msra.mxu0 0.0
      %310 = vmatprep.subr.mxu0 0.0
      %311 = vmatpush1.msra.mxu0 0.0
      %312 = vmatprep.subr.mxu0 0.0
      %313 = vmatpush1.msra.mxu0 0.0
      %314 = vmatprep.subr.mxu0 0.0
      %315 = vmatpush1.msra.mxu0 0.0
      %316 = vmatprep.subr.mxu0 0.0
      %317 = vmatpush1.msra.mxu0 0.0
      %318 = vmatprep.subr.mxu0 0.0
      %319 = vmatpush1.msra.mxu0 0.0
      %320 = vmatprep.subr.mxu0 0.0
      %321 = vmatpush1.msra.mxu0 0.0
      %322 = vmatprep.subr.mxu0 0.0
      %323 = vmatpush1.msra.mxu0 0.0
      %324 = vmatprep.subr.mxu0 0.0
      %325 = vmatpush1.msra.mxu0 0.0
      %326 = vmatprep.subr.mxu0 0.0
      %327 = vmatpush1.msra.mxu0 0.0
      %328 = vmatprep.subr.mxu0 0.0
      %329 = vmatpush1.msra.mxu0 0.0
      %330 = vmatprep.mubr.f32.mxu0 0.0
      %331 = vmatmul.mubr.f32.gmra.mrb[0].mxu0 %v260
      %v332 = vpop.f32.mrb[0].mxu0
      %v333 = vadd.f32 0.0, %v332
      %v334 = vpop.f32.mrb[0].mxu0
      %335 = vdwg.mxu0
      %v336 = vld [vmem:[%s3] sm:$0xff]
      %v337 = vld [vmem:[%s245] sm:$0xf]
      %v339 = vsel %vm258, %v336, 0
      %v342 = vsel %vm262, %v337, 0
      %344 = vmatprep.subr.mxu0 0.0
      %345 = vmatpush1.msra.mxu0 %v342
      %346 = vmatprep.subr.mxu0 0.0
      %347 = vmatpush1.msra.mxu0 0.0
      %348 = vmatprep.subr.mxu0 0.0
      %349 = vmatpush1.msra.mxu0 0.0
      %350 = vmatprep.subr.mxu0 0.0
      %351 = vmatpush1.msra.mxu0 0.0
      %352 = vmatprep.subr.mxu0 0.0
      %353 = vmatpush1.msra.mxu0 0.0
      %354 = vmatprep.subr.mxu0 0.0
      %355 = vmatpush1.msra.mxu0 0.0
      %356 = vmatprep.subr.mxu0 0.0
      %357 = vmatpush1.msra.mxu0 0.0
      %358 = vmatprep.subr.mxu0 0.0
      %359 = vmatpush1.msra.mxu0 0.0
      %360 = vmatprep.subr.mxu0 0.0
      %361 = vmatpush1.msra.mxu0 0.0
      %362 = vmatprep.subr.mxu0 0.0
      %363 = vmatpush1.msra.mxu0 0.0
      %364 = vmatprep.subr.mxu0 0.0
      %365 = vmatpush1.msra.mxu0 0.0
      %366 = vmatprep.subr.mxu0 0.0
      %367 = vmatpush1.msra.mxu0 0.0
      %368 = vmatprep.subr.mxu0 0.0
      %369 = vmatpush1.msra.mxu0 0.0
      %370 = vmatprep.subr.mxu0 0.0
      %371 = vmatpush1.msra.mxu0 0.0
      %372 = vmatprep.subr.mxu0 0.0
      %373 = vmatpush1.msra.mxu0 0.0
      %374 = vmatprep.subr.mxu0 0.0
      %375 = vmatpush1.msra.mxu0 0.0
      %376 = vmatprep.subr.mxu0 0.0
      %377 = vmatpush1.msra.mxu0 0.0
      %378 = vmatprep.subr.mxu0 0.0
      %379 = vmatpush1.msra.mxu0 0.0
      %380 = vmatprep.subr.mxu0 0.0
      %381 = vmatpush1.msra.mxu0 0.0
      %382 = vmatprep.subr.mxu0 0.0
      %383 = vmatpush1.msra.mxu0 0.0
      %384 = vmatprep.subr.mxu0 0.0
      %385 = vmatpush1.msra.mxu0 0.0
      %386 = vmatprep.subr.mxu0 0.0
      %387 = vmatpush1.msra.mxu0 0.0
      %388 = vmatprep.subr.mxu0 0.0
      %389 = vmatpush1.msra.mxu0 0.0
      %390 = vmatprep.subr.mxu0 0.0
      %391 = vmatpush1.msra.mxu0 0.0
      %392 = vmatprep.subr.mxu0 0.0
      %393 = vmatpush1.msra.mxu0 0.0
      %394 = vmatprep.subr.mxu0 0.0
      %395 = vmatpush1.msra.mxu0 0.0
      %396 = vmatprep.subr.mxu0 0.0
      %397 = vmatpush1.msra.mxu0 0.0
      %398 = vmatprep.subr.mxu0 0.0
      %399 = vmatpush1.msra.mxu0 0.0
      %400 = vmatprep.subr.mxu0 0.0
      %401 = vmatpush1.msra.mxu0 0.0
      %402 = vmatprep.subr.mxu0 0.0
      %403 = vmatpush1.msra.mxu0 0.0
      %404 = vmatprep.subr.mxu0 0.0
      %405 = vmatpush1.msra.mxu0 0.0
      %406 = vmatprep.subr.mxu0 0.0
      %407 = vmatpush1.msra.mxu0 0.0
      %408 = vmatprep.mubr.f32.mxu0 0.0
      %409 = vmatmul.mubr.f32.gmra.mrb[0].mxu0 %v339
      %v410 = vpop.f32.mrb[0].mxu0
      %v411 = vadd.f32 0.0, %v410
      %v412 = vpop.f32.mrb[0].mxu0
      %413 = vdwg.mxu0
      %414 = vadd.xlane.f32.xlu0 %v333
      %v415 = vpop.xlane.xlu0 %414
      %v416 = vmul.f32 %v333, %v333
      %417 = vadd.xlane.f32.xlu0 %v416
      %v418 = vpop.xlane.xlu0 %417
      %419 = vadd.xlane.f32.xlu0 %v411
      %v420 = vpop.xlane.xlu0 %419
      %v421 = vmul.f32 %v411, %v411
      %422 = vadd.xlane.f32.xlu0 %v421
      %v423 = vpop.xlane.xlu0 %422
      %vm424 = vcmask 7168
      %v425 = vsel %vm424, %v415, %v418
      %vm426 = vcmask 15360
      %v427 = vsel %vm426, %v425, %v420
      %vm428 = vcmask 23552
      %v429 = vsel %vm428, %v427, %v423
      %v430 = vld [vmem:[%s249] sm:$0xff]
      %v431 = vadd.f32 %v430, %v429
      %432 = vst.msk [vmem:[%s249] sm:$0xff] %vm258, %v431
      %p433 = scmp.lt.s32.totalorder %s19, 1
      %s434 = scalar_select %p433, %s19, 1
      %s435 = smul.addr %s434, 8
      %s436 = scalar_lea.vmem %s4, %s435
      // Predicated region
      $region41: #{attention_block.3} parent=35 // pred_check
        %p437 = pneg %p143
      $region42: #{attention_block.3} parent=35 // pred_check_branch
        %439 = sbr.rel (%p437) target = $region44
      $region43: #{attention_block.3} parent=35 // pred_region
        _
      $region44: #{attention_block.3} parent=35 // pred_fallthru
        _
    $region36: #{attention_block.3} parent=5 // pred_fallthru
      _
    %p440 = scmp.le.s32.totalorder 2, %s10
    // Predicated region
    $region45: #{attention_block.3} parent=5 // pred_check
      %p441 = pneg %p440
    $region46: #{attention_block.3} parent=5 // pred_check_branch
      %443 = sbr.rel (%p441) target = $region48
    $region47: #{attention_block.3} parent=5 // pred_region
      %s444 = ssub.s32 %s10, 2
      // Predicated region
      $region49: #{attention_block.3} parent=47 // pred_check
        %p445 = pneg %p149
      $region50: #{attention_block.3} parent=47 // pred_check_branch
        %447 = sbr.rel (%p445) target = $region52
      $region51: #{attention_block.3} parent=47 // pred_region
        %p448 = scmp.lt.s32.totalorder %s21, 1
        %s449 = scalar_select %p448, %s21, 1
        %s450 = smul.addr %s449, 8
        %s451 = scalar_lea.vmem %s4, %s450
      $region52: #{attention_block.3} parent=47 // pred_fallthru
        _
    $region48: #{attention_block.3} parent=5 // pred_fallthru
      _
  $region6: #{attention_block.3} parent=0 // loop_footer
    %s14 = sadd.s32 1, %s10
  $region7: #{attention_block.3} parent=0 // loop_footer_branch
    %9 = sbr.rel target = $region3
  $region8: #{attention_block.3} parent=0 // loop_exit
    _

// kernel: attention_block.5
$region0: #{attention_block.5}
  #allocation0 [shape = 'u32[]', space=smem, size = 0x4, offset = 0x4, fixed_abs, tag = 'smem constant byte address 0x4 - core index']
  #allocation1 [shape = 'u32[144,128]{1,0:T(1,128)}', space=vmem, size = 0x12000, scoped, tag = 'internal scratch']
  %s0 = inlined_call_operand.vmem [shape: f32[2,4,256], index: 0, kind: input, shape index: {}]
  %s1 = inlined_call_operand.vmem [shape: f32[2,1,256], index: 1, kind: input, shape index: {}]
  %s2 = inlined_call_operand.vmem [shape: f32[2], index: 2, kind: input, shape index: {}]
  %s3 = inlined_call_operand.vmem [shape: f32[2,4,256], index: 3, kind: output, shape index: {}]
  %s4 = sld [smem:[#allocation0]]
  $region49: #{attention_block.5} parent=0
    _
  %s6 = ssub.s32 1, %s4
  %s7 = scalar_select 0, %s6, %s4
  $region1: #{attention_block.5} parent=0
    #allocation2 [shape = 'u8[512]{0}', space=smem, size = 0x200, scoped, tag = 'input window, operand 2, single buffered']
    #allocation3 [shape = 's32[2]{0}', space=sflag, size = 0x8, scoped, tag = 'scoped memory for attention_block.5']
    %8 = vsyncpa [#allocation3], 0
    loop: start=0, step=1, limit=6
    $region2: #{attention_block.5} parent=1 // loop_pre_header
      _
    $region3: #{attention_block.5} parent=1 // loop_header
      %s10 = sphi 0, %s14
      %p11 = scmp.ge.s32.totalorder %s10, 6
      %s17 = sphi 0, %s29
      %s18 = sphi 0, %s25
      %s19 = sphi 0, %s17
      %s20 = sphi 0, %s18
      %s21 = sphi 0, %s19
      %s22 = sphi 0, %s20
      %s34 = sphi 0, %s36
      %s37 = sphi 0, %s34
      %s38 = sphi 0, %s37
      %s54 = sphi 0, %s38
      %s62 = sphi 0, %s64
      %s65 = sphi 0, %s62
      %s66 = sphi 0, %s65
      %s82 = sphi 0, %s66
      %s86 = sphi 0, %s86
      %s88 = sphi 0, %s86
      %s89 = sphi 0, %s88
      %s103 = sphi 0, %s89
      %s111 = sphi 0, %s113
      %s114 = sphi 0, %s111
      %s115 = sphi 0, %s114
      %s131 = sphi 0, %s115
    $region4: #{attention_block.5} parent=1 // loop_header_branch
      %13 = sbr.rel (%p11) target = $region8
    $region5: #{attention_block.5} parent=1 // loop_body
      %s15 = ssub.s32 %s10, 1
      %s16 = ssub.s32 %s10, 2
      %s23 = sadd.s32 1, %s18
      %p24 = scmp.ge.s32.totalorder %s23, 2
      %s25 = scalar_select %p24, 0, %s23
      %s26 = sadd.s32 1, %s17
      %s27 = scalar_select %p24, %s26, %s17
      %p28 = scmp.ge.s32.totalorder %s27, 2
      %s29 = scalar_select %p28, 0, %s27
      %s30 = ssub.s32 %s17, %s29
      %s31 = ssub.s32 %s18, %s25
      %s32 = sor.u32 %s30, %s31
      %p33 = scmp.eq.s32.totalorder %s32, 0
      %s35 = sadd.s32 %s34, 1
      %s36 = scalar_select %p33, %s34, %s35
      %p39 = pneg %p33
      %p40 = scmp.eq.s32.totalorder %s10, 3
      %p41 = por %p39, %p40
      %p42 = scmp.ne.s32.totalorder %s34, %s37
      %p43 = scmp.eq.s32.totalorder %s10, 0
      %p44 = por %p42, %p43
      %p45 = scmp.ne.s32.totalorder %s34, %s37
      %p46 = scmp.eq.s32.totalorder %s15, 3
      %p47 = por %p45, %p46
      %p48 = scmp.ne.s32.totalorder %s37, %s38
      %p49 = scmp.eq.s32.totalorder %s15, 0
      %p50 = por %p48, %p49
      %p51 = scmp.ne.s32.totalorder %s37, %s38
      %p52 = scmp.eq.s32.totalorder %s16, 3
      %p53 = por %p51, %p52
      %p55 = scmp.ne.s32.totalorder %s38, %s54
      %p56 = scmp.eq.s32.totalorder %s16, 0
      %p57 = por %p55, %p56
      %s58 = ssub.s32 %s17, %s29
      %s59 = ssub.s32 %s18, %s25
      %s60 = sor.u32 %s58, %s59
      %p61 = scmp.eq.s32.totalorder %s60, 0
      %s63 = sadd.s32 %s62, 1
      %s64 = scalar_select %p61, %s62, %s63
      %p67 = pneg %p61
      %p68 = scmp.eq.s32.totalorder %s10, 3
      %p69 = por %p67, %p68
      %p70 = scmp.ne.s32.totalorder %s62, %s65
      %p71 = scmp.eq.s32.totalorder %s10, 0
      %p72 = por %p70, %p71
      %p73 = scmp.ne.s32.totalorder %s62, %s65
      %p74 = scmp.eq.s32.totalorder %s15, 3
      %p75 = por %p73, %p74
      %p76 = scmp.ne.s32.totalorder %s65, %s66
      %p77 = scmp.eq.s32.totalorder %s15, 0
      %p78 = por %p76, %p77
      %p79 = scmp.ne.s32.totalorder %s65, %s66
      %p80 = scmp.eq.s32.totalorder %s16, 3
      %p81 = por %p79, %p80
      %p83 = scmp.ne.s32.totalorder %s66, %s82
      %p84 = scmp.eq.s32.totalorder %s16, 0
      %p85 = por %p83, %p84
      %s87 = sadd.s32 %s86, 1
      %p90 = scmp.eq.s32.totalorder %s10, 3
      %p91 = scmp.ne.s32.totalorder %s86, %s88
      %p92 = scmp.eq.s32.totalorder %s10, 0
      %p93 = por %p91, %p92
      %p94 = scmp.ne.s32.totalorder %s86, %s88
      %p95 = scmp.eq.s32.totalorder %s15, 3
      %p96 = por %p94, %p95
      %p97 = scmp.ne.s32.totalorder %s88, %s89
      %p98 = scmp.eq.s32.totalorder %s15, 0
      %p99 = por %p97, %p98
      %p100 = scmp.ne.s32.totalorder %s88, %s89
      %p101 = scmp.eq.s32.totalorder %s16, 3
      %p102 = por %p100, %p101
      %p104 = scmp.ne.s32.totalorder %s89, %s103
      %p105 = scmp.eq.s32.totalorder %s16, 0
      %p106 = por %p104, %p105
      %s107 = ssub.s32 %s17, %s29
      %s108 = ssub.s32 %s18, %s25
      %s109 = sor.u32 %s107, %s108
      %p110 = scmp.eq.s32.totalorder %s109, 0
      %s112 = sadd.s32 %s111, 1
      %s113 = scalar_select %p110, %s111, %s112
      %p116 = pneg %p110
      %p117 = scmp.eq.s32.totalorder %s10, 3
      %p118 = por %p116, %p117
      %p119 = scmp.ne.s32.totalorder %s111, %s114
      %p120 = scmp.eq.s32.totalorder %s10, 0
      %p121 = por %p119, %p120
      %p122 = scmp.ne.s32.totalorder %s111, %s114
      %p123 = scmp.eq.s32.totalorder %s15, 3
      %p124 = por %p122, %p123
      %p125 = scmp.ne.s32.totalorder %s114, %s115
      %p126 = scmp.eq.s32.totalorder %s15, 0
      %p127 = por %p125, %p126
      %p128 = scmp.ne.s32.totalorder %s114, %s115
      %p129 = scmp.eq.s32.totalorder %s16, 3
      %p130 = por %p128, %p129
      %p132 = scmp.ne.s32.totalorder %s115, %s131
      %p133 = scmp.eq.s32.totalorder %s16, 0
      %p134 = por %p132, %p133
      %p135 = scmp.le.s32.totalorder 1, %s10
      %p136 = scmp.lt.s32.totalorder %s10, 5
      %p137 = pnand %p135, %p136
      %p138 = pneg %p137
      // Predicated region
      $region9: #{attention_block.5} parent=5 // pred_check
        _
      $region10: #{attention_block.5} parent=5 // pred_check_branch
        %140 = sbr.rel (%p137) target = $region12
      $region11: #{attention_block.5} parent=5 // pred_region
        %s141 = ssub.s32 %s10, 1
        // Predicated region
        $region13: #{attention_block.5} parent=11 // pred_check
          %p142 = pneg %p99
        $region14: #{attention_block.5} parent=11 // pred_check_branch
          %144 = sbr.rel (%p142) target = $region16
        $region15: #{attention_block.5} parent=11 // pred_region
          %s146 = ssub.s32 16, 16
          %147 = vsyncadd [#allocation3], %s146
          %s149 = sshll.u32 %s2, 4
          %s150 = int_to_ptr.vmem [resolvable:$true] %s149
          %152 = dma.vmem_to_smem %s150, 16, [#allocation2], [#allocation3]
        $region16: #{attention_block.5} parent=11 // pred_fallthru
          _
      $region12: #{attention_block.5} parent=5 // pred_fallthru
        _
      %p153 = scmp.lt.s32.totalorder %s10, 4
      // Predicated region
      $region17: #{attention_block.5} parent=5 // pred_check
        %p154 = pneg %p153
      $region18: #{attention_block.5} parent=5 // pred_check_branch
        %156 = sbr.rel (%p154) target = $region20
      $region19: #{attention_block.5} parent=5 // pred_region
        // Predicated region
        $region21: #{attention_block.5} parent=19 // pred_check
          %p157 = pneg %p44
        $region22: #{attention_block.5} parent=19 // pred_check_branch
          %159 = sbr.rel (%p157) target = $region24
        $region23: #{attention_block.5} parent=19 // pred_region
          %p160 = scmp.lt.s32.totalorder %s17, 1
          %s161 = scalar_select %p160, %s17, 1
          %p162 = scmp.lt.s32.totalorder %s18, 1
          %s163 = scalar_select %p162, %s18, 1
          %s164 = smul.addr %s161, 2
          %s165 = sadd.s32 %s163, %s164
          %s166 = smul.addr %s165, 4
          %s167 = scalar_lea.vmem %s0, %s166
        $region24: #{attention_block.5} parent=19 // pred_fallthru
          _
        // Predicated region
        $region25: #{attention_block.5} parent=19 // pred_check
          %p168 = pneg %p72
        $region26: #{attention_block.5} parent=19 // pred_check_branch
          %170 = sbr.rel (%p168) target = $region28
        $region27: #{attention_block.5} parent=19 // pred_region
          %p171 = scmp.lt.s32.totalorder %s17, 1
          %s172 = scalar_select %p171, %s17, 1
          %p173 = scmp.lt.s32.totalorder %s18, 1
          %s174 = scalar_select %p173, %s18, 1
          %s175 = smul.addr %s172, 2
          %s176 = sadd.s32 %s174, %s175
          %s177 = scalar_lea.vmem %s1, %s176
        $region28: #{attention_block.5} parent=19 // pred_fallthru
          _
      $region20: #{attention_block.5} parent=5 // pred_fallthru
        _
      %p178 = scmp.le.s32.totalorder 1, %s10
      %p179 = scmp.lt.s32.totalorder %s10, 5
      %p180 = pnand %p178, %p179
      %p181 = pneg %p180
      // Predicated region
      $region29: #{attention_block.5} parent=5 // pred_check
        _
      $region30: #{attention_block.5} parent=5 // pred_check_branch
        %183 = sbr.rel (%p180) target = $region32
      $region31: #{attention_block.5} parent=5 // pred_region
        %s184 = ssub.s32 %s10, 1
        // Predicated region
        $region33: #{attention_block.5} parent=31 // pred_check
          %p185 = pneg %p99
        $region34: #{attention_block.5} parent=31 // pred_check_branch
          %187 = sbr.rel (%p185) target = $region36
        $region35: #{attention_block.5} parent=31 // pred_region
          %188 = dma.done [#allocation3], 16
        $region36: #{attention_block.5} parent=31 // pred_fallthru
          _
        %189 = sfence
        %p190 = scmp.lt.s32.totalorder %s19, 1
        %s191 = scalar_select %p190, %s19, 1
        %p192 = scmp.lt.s32.totalorder %s20, 1
        %s193 = scalar_select %p192, %s20, 1
        %s194 = smul.addr %s191, 2
        %s195 = sadd.s32 %s193, %s194
        %s196 = smul.addr %s195, 4
        %s197 = scalar_lea.vmem %s0, %s196
        %p198 = pneg %p50
        %p199 = pneg %p47
        %p200 = scmp.lt.s32.totalorder %s19, 1
        %s201 = scalar_select %p200, %s19, 1
        %p202 = scmp.lt.s32.totalorder %s20, 1
        %s203 = scalar_select %p202, %s20, 1
        %s204 = smul.addr %s201, 2
        %s205 = sadd.s32 %s203, %s204
        %s206 = scalar_lea.vmem %s1, %s205
        %p207 = pneg %p78
        %p208 = pneg %p75
        %p209 = pneg %p99
        %p210 = pneg %p96
        %p211 = pneg %p127
        %p212 = pneg %p124
        %p213 = scmp.lt.s32.totalorder %s19, 1
        %s214 = scalar_select %p213, %s19, 1
        %p215 = scmp.lt.s32.totalorder %s20, 1
        %s216 = scalar_select %p215, %s20, 1
        %s217 = smul.addr %s214, 2
        %s218 = sadd.s32 %s216, %s217
        %s219 = smul.addr %s218, 4
        %s220 = scalar_lea.vmem %s3, %s219
        %p221 = scmp.lt.s32.totalorder %s19, 1
        %s222 = scalar_select %p221, %s19, 1
        %p223 = scmp.lt.s32.totalorder %s20, 1
        %s224 = scalar_select %p223, %s20, 1
        %s225 = smul.addr %s222, 2
        %s226 = sadd.s32 %s224, %s225
        %s227 = smul.addr %s226, 4
        %s228 = scalar_lea.vmem %s0, %s227
        %p229 = scmp.lt.s32.totalorder %s19, 1
        %s230 = scalar_select %p229, %s19, 1
        %p231 = scmp.lt.s32.totalorder %s20, 1
        %s232 = scalar_select %p231, %s20, 1
        %s233 = smul.addr %s230, 2
        %s234 = sadd.s32 %s232, %s233
        %s235 = scalar_lea.vmem %s1, %s234
        %p236 = scmp.lt.s32.totalorder %s19, 1
        %s237 = scalar_select %p236, %s19, 1
        %p238 = scmp.lt.s32.totalorder %s20, 1
        %s239 = scalar_select %p238, %s20, 1
        %s240 = smul.addr %s237, 2
        %s241 = sadd.s32 %s239, %s240
        %s242 = smul.addr %s241, 4
        %s243 = scalar_lea.vmem %s3, %s242
        %v244 = vld [vmem:[%s235] sm:$0x1]
        %s245 = sld [smem:[#allocation2]]
        %v246 = vstv %s245
        %v247 = vmul.f32 %v244, %v246
        %s248 = sld [smem:[#allocation2 + $0x1]]
        %v249 = vstv %s248
        %v250 = vadd.f32 %v247, %v249
        %v251 = vxor.u32 %v250, 2147483648
        %v252 = vmul.f32 %v251, 1.442695
        %v253 = vpow.pop %v252
        %v254 = vadd.f32 %v253, 1.0
        %v255 = vrcp.pop %v254
        %v256 = vmul.f32 1.0, %v255
        %v257 = vld [vmem:[%s228] sm:$0xf]
        %v259 = vlaneseq
        %v260 = vshrl.u32 %v259, 7
        %v261 = vsub.s32 0, %v260
        %v262 = vrot.slane %v256, %v261
        %v264 = vmul.f32 %v257, %v262
        %265 = vst [vmem:[%s243] sm:$0xf] %v264
        %p266 = scmp.lt.s32.totalorder %s19, 1
        %s267 = scalar_select %p266, %s19, 1
        %p268 = scmp.lt.s32.totalorder %s20, 1
        %s269 = scalar_select %p268, %s20, 1
        %s270 = smul.addr %s267, 2
        %s271 = sadd.s32 %s269, %s270
        %s272 = smul.addr %s271, 4
        %s273 = scalar_lea.vmem %s3, %s272
        // Predicated region
        $region37: #{attention_block.5} parent=31 // pred_check
          %p274 = pneg %p124
        $region38: #{attention_block.5} parent=31 // pred_check_branch
          %276 = sbr.rel (%p274) target = $region40
        $region39: #{attention_block.5} parent=31 // pred_region
          _
        $region40: #{attention_block.5} parent=31 // pred_fallthru
          _
      $region32: #{attention_block.5} parent=5 // pred_fallthru
        _
      %p277 = scmp.le.s32.totalorder 2, %s10
      // Predicated region
      $region41: #{attention_block.5} parent=5 // pred_check
        %p278 = pneg %p277
      $region42: #{attention_block.5} parent=5 // pred_check_branch
        %280 = sbr.rel (%p278) target = $region44
      $region43: #{attention_block.5} parent=5 // pred_region
        %s281 = ssub.s32 %s10, 2
        // Predicated region
        $region45: #{attention_block.5} parent=43 // pred_check
          %p282 = pneg %p130
        $region46: #{attention_block.5} parent=43 // pred_check_branch
          %284 = sbr.rel (%p282) target = $region48
        $region47: #{attention_block.5} parent=43 // pred_region
          %p285 = scmp.lt.s32.totalorder %s21, 1
          %s286 = scalar_select %p285, %s21, 1
          %p287 = scmp.lt.s32.totalorder %s22, 1
          %s288 = scalar_select %p287, %s22, 1
          %s289 = smul.addr %s286, 2
          %s290 = sadd.s32 %s288, %s289
          %s291 = smul.addr %s290, 4
          %s292 = scalar_lea.vmem %s3, %s291
        $region48: #{attention_block.5} parent=43 // pred_fallthru
          _
      $region44: #{attention_block.5} parent=5 // pred_fallthru
        _
    $region6: #{attention_block.5} parent=1 // loop_footer
      %s14 = sadd.s32 1, %s10
    $region7: #{attention_block.5} parent=1 // loop_footer_branch
      %9 = sbr.rel target = $region3
    $region8: #{attention_block.5} parent=1 // loop_exit
      _
    %293 = vsyncpa [#allocation3], 1
    %s294 = scalar_lea.sflag [#allocation3], 1
    %295 = vsyncpa %s294, 1

// kernel: attention_block.4
$region0: #{attention_block.4}
  #allocation0 [shape = 'u32[]', space=smem, size = 0x4, offset = 0x4, fixed_abs, tag = 'smem constant byte address 0x4 - core index']
  #allocation1 [shape = 'u32[144,128]{1,0:T(1,128)}', space=vmem, size = 0x12000, scoped, tag = 'internal scratch']
  %s0 = inlined_call_operand.vmem [shape: f32[2,4,256], index: 0, kind: input, shape index: {}]
  %s1 = inlined_call_operand.vmem [shape: f32[2,4,256], index: 1, kind: input, shape index: {}]
  %s2 = inlined_call_operand.vmem [shape: f32[8,4], index: 2, kind: input, shape index: {}]
  %s3 = inlined_call_operand.vmem [shape: f32[8,4], index: 3, kind: input, shape index: {}]
  %s4 = inlined_call_operand.vmem [shape: f32[8,2], index: 4, kind: input, shape index: {}]
  %s5 = inlined_call_operand.vmem [shape: f32[2,1,256], index: 5, kind: output, shape index: {0}]
  %s6 = inlined_call_operand.vmem [shape: f32[2,1,2], index: 6, kind: output, shape index: {1}]
  %7 = xla_tuple %s5, %s6
  %s8 = sld [smem:[#allocation0]]
  $region65: #{attention_block.4} parent=0
    _
  %s10 = ssub.s32 1, %s8
  %s11 = scalar_select 0, %s10, %s8
  loop: start=0, step=1, limit=6
  $region2: #{attention_block.4} parent=0 // loop_pre_header
    _
  $region3: #{attention_block.4} parent=0 // loop_header
    %s13 = sphi 0, %s17
    %p14 = scmp.ge.s32.totalorder %s13, 6
    %s20 = sphi 0, %s32
    %s21 = sphi 0, %s28
    %s22 = sphi 0, %s20
    %s23 = sphi 0, %s21
    %s24 = sphi 0, %s22
    %s25 = sphi 0, %s23
    %s37 = sphi 0, %s39
    %s40 = sphi 0, %s37
    %s41 = sphi 0, %s40
    %s57 = sphi 0, %s41
    %s65 = sphi 0, %s67
    %s68 = sphi 0, %s65
    %s69 = sphi 0, %s68
    %s85 = sphi 0, %s69
    %s89 = sphi 0, %s89
    %s91 = sphi 0, %s89
    %s92 = sphi 0, %s91
    %s106 = sphi 0, %s92
    %s110 = sphi 0, %s110
    %s112 = sphi 0, %s110
    %s113 = sphi 0, %s112
    %s127 = sphi 0, %s113
    %s131 = sphi 0, %s131
    %s133 = sphi 0, %s131
    %s134 = sphi 0, %s133
    %s148 = sphi 0, %s134
    %s156 = sphi 0, %s158
    %s159 = sphi 0, %s156
    %s160 = sphi 0, %s159
    %s176 = sphi 0, %s160
    %s182 = sphi 0, %s184
    %s185 = sphi 0, %s182
    %s186 = sphi 0, %s185
    %s202 = sphi 0, %s186
  $region4: #{attention_block.4} parent=0 // loop_header_branch
    %16 = sbr.rel (%p14) target = $region8
  $region5: #{attention_block.4} parent=0 // loop_body
    %s18 = ssub.s32 %s13, 1
    %s19 = ssub.s32 %s13, 2
    %s26 = sadd.s32 1, %s21
    %p27 = scmp.ge.s32.totalorder %s26, 2
    %s28 = scalar_select %p27, 0, %s26
    %s29 = sadd.s32 1, %s20
    %s30 = scalar_select %p27, %s29, %s20
    %p31 = scmp.ge.s32.totalorder %s30, 2
    %s32 = scalar_select %p31, 0, %s30
    %s33 = ssub.s32 %s20, %s32
    %s34 = ssub.s32 %s21, %s28
    %s35 = sor.u32 %s33, %s34
    %p36 = scmp.eq.s32.totalorder %s35, 0
    %s38 = sadd.s32 %s37, 1
    %s39 = scalar_select %p36, %s37, %s38
    %p42 = pneg %p36
    %p43 = scmp.eq.s32.totalorder %s13, 3
    %p44 = por %p42, %p43
    %p45 = scmp.ne.s32.totalorder %s37, %s40
    %p46 = scmp.eq.s32.totalorder %s13, 0
    %p47 = por %p45, %p46
    %p48 = scmp.ne.s32.totalorder %s37, %s40
    %p49 = scmp.eq.s32.totalorder %s18, 3
    %p50 = por %p48, %p49
    %p51 = scmp.ne.s32.totalorder %s40, %s41
    %p52 = scmp.eq.s32.totalorder %s18, 0
    %p53 = por %p51, %p52
    %p54 = scmp.ne.s32.totalorder %s40, %s41
    %p55 = scmp.eq.s32.totalorder %s19, 3
    %p56 = por %p54, %p55
    %p58 = scmp.ne.s32.totalorder %s41, %s57
    %p59 = scmp.eq.s32.totalorder %s19, 0
    %p60 = por %p58, %p59
    %s61 = ssub.s32 %s20, %s32
    %s62 = ssub.s32 %s21, %s28
    %s63 = sor.u32 %s61, %s62
    %p64 = scmp.eq.s32.totalorder %s63, 0
    %s66 = sadd.s32 %s65, 1
    %s67 = scalar_select %p64, %s65, %s66
    %p70 = pneg %p64
    %p71 = scmp.eq.s32.totalorder %s13, 3
    %p72 = por %p70, %p71
    %p73 = scmp.ne.s32.totalorder %s65, %s68
    %p74 = scmp.eq.s32.totalorder %s13, 0
    %p75 = por %p73, %p74
    %p76 = scmp.ne.s32.totalorder %s65, %s68
    %p77 = scmp.eq.s32.totalorder %s18, 3
    %p78 = por %p76, %p77
    %p79 = scmp.ne.s32.totalorder %s68, %s69
    %p80 = scmp.eq.s32.totalorder %s18, 0
    %p81 = por %p79, %p80
    %p82 = scmp.ne.s32.totalorder %s68, %s69
    %p83 = scmp.eq.s32.totalorder %s19, 3
    %p84 = por %p82, %p83
    %p86 = scmp.ne.s32.totalorder %s69, %s85
    %p87 = scmp.eq.s32.totalorder %s19, 0
    %p88 = por %p86, %p87
    %s90 = sadd.s32 %s89, 1
    %p93 = scmp.eq.s32.totalorder %s13, 3
    %p94 = scmp.ne.s32.totalorder %s89, %s91
    %p95 = scmp.eq.s32.totalorder %s13, 0
    %p96 = por %p94, %p95
    %p97 = scmp.ne.s32.totalorder %s89, %s91
    %p98 = scmp.eq.s32.totalorder %s18, 3
    %p99 = por %p97, %p98
    %p100 = scmp.ne.s32.totalorder %s91, %s92
    %p101 = scmp.eq.s32.totalorder %s18, 0
    %p102 = por %p100, %p101
    %p103 = scmp.ne.s32.totalorder %s91, %s92
    %p104 = scmp.eq.s32.totalorder %s19, 3
    %p105 = por %p103, %p104
    %p107 = scmp.ne.s32.totalorder %s92, %s106
    %p108 = scmp.eq.s32.totalorder %s19, 0
    %p109 = por %p107, %p108
    %s111 = sadd.s32 %s110, 1
    %p114 = scmp.eq.s32.totalorder %s13, 3
    %p115 = scmp.ne.s32.totalorder %s110, %s112
    %p116 = scmp.eq.s32.totalorder %s13, 0
    %p117 = por %p115, %p116
    %p118 = scmp.ne.s32.totalorder %s110, %s112
    %p119 = scmp.eq.s32.totalorder %s18, 3
    %p120 = por %p118, %p119
    %p121 = scmp.ne.s32.totalorder %s112, %s113
    %p122 = scmp.eq.s32.totalorder %s18, 0
    %p123 = por %p121, %p122
    %p124 = scmp.ne.s32.totalorder %s112, %s113
    %p125 = scmp.eq.s32.totalorder %s19, 3
    %p126 = por %p124, %p125
    %p128 = scmp.ne.s32.totalorder %s113, %s127
    %p129 = scmp.eq.s32.totalorder %s19, 0
    %p130 = por %p128, %p129
    %s132 = sadd.s32 %s131, 1
    %p135 = scmp.eq.s32.totalorder %s13, 3
    %p136 = scmp.ne.s32.totalorder %s131, %s133
    %p137 = scmp.eq.s32.totalorder %s13, 0
    %p138 = por %p136, %p137
    %p139 = scmp.ne.s32.totalorder %s131, %s133
    %p140 = scmp.eq.s32.totalorder %s18, 3
    %p141 = por %p139, %p140
    %p142 = scmp.ne.s32.totalorder %s133, %s134
    %p143 = scmp.eq.s32.totalorder %s18, 0
    %p144 = por %p142, %p143
    %p145 = scmp.ne.s32.totalorder %s133, %s134
    %p146 = scmp.eq.s32.totalorder %s19, 3
    %p147 = por %p145, %p146
    %p149 = scmp.ne.s32.totalorder %s134, %s148
    %p150 = scmp.eq.s32.totalorder %s19, 0
    %p151 = por %p149, %p150
    %s152 = ssub.s32 %s20, %s32
    %s153 = ssub.s32 %s21, %s28
    %s154 = sor.u32 %s152, %s153
    %p155 = scmp.eq.s32.totalorder %s154, 0
    %s157 = sadd.s32 %s156, 1
    %s158 = scalar_select %p155, %s156, %s157
    %p161 = pneg %p155
    %p162 = scmp.eq.s32.totalorder %s13, 3
    %p163 = por %p161, %p162
    %p164 = scmp.ne.s32.totalorder %s156, %s159
    %p165 = scmp.eq.s32.totalorder %s13, 0
    %p166 = por %p164, %p165
    %p167 = scmp.ne.s32.totalorder %s156, %s159
    %p168 = scmp.eq.s32.totalorder %s18, 3
    %p169 = por %p167, %p168
    %p170 = scmp.ne.s32.totalorder %s159, %s160
    %p171 = scmp.eq.s32.totalorder %s18, 0
    %p172 = por %p170, %p171
    %p173 = scmp.ne.s32.totalorder %s159, %s160
    %p174 = scmp.eq.s32.totalorder %s19, 3
    %p175 = por %p173, %p174
    %p177 = scmp.ne.s32.totalorder %s160, %s176
    %p178 = scmp.eq.s32.totalorder %s19, 0
    %p179 = por %p177, %p178
    %s180 = ssub.s32 %s20, %s32
    %p181 = scmp.eq.s32.totalorder %s180, 0
    %s183 = sadd.s32 %s182, 1
    %s184 = scalar_select %p181, %s182, %s183
    %p187 = pneg %p181
    %p188 = scmp.eq.s32.totalorder %s13, 3
    %p189 = por %p187, %p188
    %p190 = scmp.ne.s32.totalorder %s182, %s185
    %p191 = scmp.eq.s32.totalorder %s13, 0
    %p192 = por %p190, %p191
    %p193 = scmp.ne.s32.totalorder %s182, %s185
    %p194 = scmp.eq.s32.totalorder %s18, 3
    %p195 = por %p193, %p194
    %p196 = scmp.ne.s32.totalorder %s185, %s186
    %p197 = scmp.eq.s32.totalorder %s18, 0
    %p198 = por %p196, %p197
    %p199 = scmp.ne.s32.totalorder %s185, %s186
    %p200 = scmp.eq.s32.totalorder %s19, 3
    %p201 = por %p199, %p200
    %p203 = scmp.ne.s32.totalorder %s186, %s202
    %p204 = scmp.eq.s32.totalorder %s19, 0
    %p205 = por %p203, %p204
    %p206 = scmp.le.s32.totalorder 1, %s13
    %p207 = scmp.lt.s32.totalorder %s13, 5
    %p208 = pnand %p206, %p207
    %p209 = pneg %p208
    // Predicated region
    $region9: #{attention_block.4} parent=5 // pred_check
      _
    $region10: #{attention_block.4} parent=5 // pred_check_branch
      %211 = sbr.rel (%p208) target = $region12
    $region11: #{attention_block.4} parent=5 // pred_region
      %s212 = ssub.s32 %s13, 1
      // Predicated region
      $region13: #{attention_block.4} parent=11 // pred_check
        %p213 = pneg %p102
      $region14: #{attention_block.4} parent=11 // pred_check_branch
        %215 = sbr.rel (%p213) target = $region16
      $region15: #{attention_block.4} parent=11 // pred_region
        _
      $region16: #{attention_block.4} parent=11 // pred_fallthru
        _
      // Predicated region
      $region17: #{attention_block.4} parent=11 // pred_check
        %p216 = pneg %p123
      $region18: #{attention_block.4} parent=11 // pred_check_branch
        %218 = sbr.rel (%p216) target = $region20
      $region19: #{attention_block.4} parent=11 // pred_region
        _
      $region20: #{attention_block.4} parent=11 // pred_fallthru
        _
      // Predicated region
      $region21: #{attention_block.4} parent=11 // pred_check
        %p219 = pneg %p144
      $region22: #{attention_block.4} parent=11 // pred_check_branch
        %221 = sbr.rel (%p219) target = $region24
      $region23: #{attention_block.4} parent=11 // pred_region
        _
      $region24: #{attention_block.4} parent=11 // pred_fallthru
        _
    $region12: #{attention_block.4} parent=5 // pred_fallthru
      _
    %p222 = scmp.lt.s32.totalorder %s13, 4
    // Predicated region
    $region25: #{attention_block.4} parent=5 // pred_check
      %p223 = pneg %p222
    $region26: #{attention_block.4} parent=5 // pred_check_branch
      %225 = sbr.rel (%p223) target = $region28
    $region27: #{attention_block.4} parent=5 // pred_region
      // Predicated region
      $region29: #{attention_block.4} parent=27 // pred_check
        %p226 = pneg %p47
      $region30: #{attention_block.4} parent=27 // pred_check_branch
        %228 = sbr.rel (%p226) target = $region32
      $region31: #{attention_block.4} parent=27 // pred_region
        %p229 = scmp.lt.s32.totalorder %s20, 1
        %s230 = scalar_select %p229, %s20, 1
        %p231 = scmp.lt.s32.totalorder %s21, 1
        %s232 = scalar_select %p231, %s21, 1
        %s233 = smul.addr %s230, 2
        %s234 = sadd.s32 %s232, %s233
        %s235 = smul.addr %s234, 4
        %s236 = scalar_lea.vmem %s0, %s235
      $region32: #{attention_block.4} parent=27 // pred_fallthru
        _
      // Predicated region
      $region33: #{attention_block.4} parent=27 // pred_check
        %p237 = pneg %p75
      $region34: #{attention_block.4} parent=27 // pred_check_branch
        %239 = sbr.rel (%p237) target = $region36
      $region35: #{attention_block.4} parent=27 // pred_region
        %p240 = scmp.lt.s32.totalorder %s20, 1
        %s241 = scalar_select %p240, %s20, 1
        %p242 = scmp.lt.s32.totalorder %s21, 1
        %s243 = scalar_select %p242, %s21, 1
        %s244 = smul.addr %s241, 2
        %s245 = sadd.s32 %s243, %s244
        %s246 = smul.addr %s245, 4
        %s247 = scalar_lea.vmem %s1, %s246
      $region36: #{attention_block.4} parent=27 // pred_fallthru
        _
    $region28: #{attention_block.4} parent=5 // pred_fallthru
      _
    %p248 = scmp.le.s32.totalorder 1, %s13
    %p249 = scmp.lt.s32.totalorder %s13, 5
    %p250 = pnand %p248, %p249
    %p251 = pneg %p250
    // Predicated region
    $region37: #{attention_block.4} parent=5 // pred_check
      _
    $region38: #{attention_block.4} parent=5 // pred_check_branch
      %253 = sbr.rel (%p250) target = $region40
    $region39: #{attention_block.4} parent=5 // pred_region
      %s254 = ssub.s32 %s13, 1
      %p255 = scmp.lt.s32.totalorder %s22, 1
      %s256 = scalar_select %p255, %s22, 1
      %p257 = scmp.lt.s32.totalorder %s23, 1
      %s258 = scalar_select %p257, %s23, 1
      %s259 = smul.addr %s256, 2
      %s260 = sadd.s32 %s258, %s259
      %s261 = smul.addr %s260, 4
      %s262 = scalar_lea.vmem %s0, %s261
      %p263 = pneg %p53
      %p264 = pneg %p50
      %p265 = scmp.lt.s32.totalorder %s22, 1
      %s266 = scalar_select %p265, %s22, 1
      %p267 = scmp.lt.s32.totalorder %s23, 1
      %s268 = scalar_select %p267, %s23, 1
      %s269 = smul.addr %s266, 2
      %s270 = sadd.s32 %s268, %s269
      %s271 = smul.addr %s270, 4
      %s272 = scalar_lea.vmem %s1, %s271
      %p273 = pneg %p81
      %p274 = pneg %p78
      %p275 = pneg %p102
      %p276 = pneg %p99
      %p277 = pneg %p123
      %p278 = pneg %p120
      %p279 = pneg %p144
      %p280 = pneg %p141
      %p281 = pneg %p172
      %p282 = pneg %p169
      %p283 = scmp.lt.s32.totalorder %s22, 1
      %s284 = scalar_select %p283, %s22, 1
      %p285 = scmp.lt.s32.totalorder %s23, 1
      %s286 = scalar_select %p285, %s23, 1
      %s287 = smul.addr %s284, 2
      %s288 = sadd.s32 %s286, %s287
      %s289 = scalar_lea.vmem %s5, %s288
      %p290 = pneg %p198
      %p291 = pneg %p195
      %p292 = scmp.lt.s32.totalorder %s22, 1
      %s293 = scalar_select %p292, %s22, 1
      %s294 = scalar_lea.vmem %s6, %s293
      %p295 = scmp.lt.s32.totalorder %s22, 1
      %s296 = scalar_select %p295, %s22, 1
      %p297 = scmp.lt.s32.totalorder %s23, 1
      %s298 = scalar_select %p297, %s23, 1
      %s299 = smul.addr %s296, 2
      %s300 = sadd.s32 %s298, %s299
      %s301 = smul.addr %s300, 4
      %s302 = scalar_lea.vmem %s0, %s301
      %p303 = scmp.lt.s32.totalorder %s22, 1
      %s304 = scalar_select %p303, %s22, 1
      %p305 = scmp.lt.s32.totalorder %s23, 1
      %s306 = scalar_select %p305, %s23, 1
      %s307 = smul.addr %s304, 2
      %s308 = sadd.s32 %s306, %s307
      %s309 = smul.addr %s308, 4
      %s310 = scalar_lea.vmem %s1, %s309
      %p311 = scmp.lt.s32.totalorder %s22, 1
      %s312 = scalar_select %p311, %s22, 1
      %p313 = scmp.lt.s32.totalorder %s23, 1
      %s314 = scalar_select %p313, %s23, 1
      %s315 = smul.addr %s312, 2
      %s316 = sadd.s32 %s314, %s315
      %s317 = scalar_lea.vmem %s5, %s316
      %p318 = scmp.lt.s32.totalorder %s22, 1
      %s319 = scalar_select %p318, %s22, 1
      %s320 = scalar_lea.vmem %s6, %s319
      %p321 = scmp.eq.s32.totalorder %s23, 0
      // Predicated region
      $region41: #{attention_block.4} parent=39 // pred_check
        %p322 = pneg %p321
      $region42: #{attention_block.4} parent=39 // pred_check_branch
        %324 = sbr.rel (%p322) target = $region44
      $region43: #{attention_block.4} parent=39 // pred_region
        %vm325 = vcmask 8192
        %326 = vst.msk [vmem:[%s320] sm:$0x1] %vm325, 0.0
      $region44: #{attention_block.4} parent=39 // pred_fallthru
        _
      %v327 = vld [vmem:[%s2] sm:$0xff]
      %v328 = vld [vmem:[%s302] sm:$0xf]
      %v329 = vld [vmem:[%s3] sm:$0xff]
      %v330 = vld [vmem:[%s310] sm:$0xf]
      %vm331 = vcmask 31744
      %v333 = vsel %vm331, %v329, 0
      %vm335 = vcmask 1043456
      %v337 = vsel %vm335, %v330, 0
      %339 = vmatprep.subr.mxu0 0.0
      %340 = vmatpush1.msra.mxu0 %v337
      %341 = vmatprep.subr.mxu0 0.0
      %342 = vmatpush1.msra.mxu0 0.0
      %343 = vmatprep.subr.mxu0 0.0
      %344 = vmatpush1.msra.mxu0 0.0
      %345 = vmatprep.subr.mxu0 0.0
      %346 = vmatpush1.msra.mxu0 0.0
      %347 = vmatprep.subr.mxu0 0.0
      %348 = vmatpush1.msra.mxu0 0.0
      %349 = vmatprep.subr.mxu0 0.0
      %350 = vmatpush1.msra.mxu0 0.0
      %351 = vmatprep.subr.mxu0 0.0
      %352 = vmatpush1.msra.mxu0 0.0
      %353 = vmatprep.subr.mxu0 0.0
      %354 = vmatpush1.msra.mxu0 0.0
      %355 = vmatprep.subr.mxu0 0.0
      %356 = vmatpush1.msra.mxu0 0.0
      %357 = vmatprep.subr.mxu0 0.0
      %358 = vmatpush1.msra.mxu0 0.0
      %359 = vmatprep.subr.mxu0 0.0
      %360 = vmatpush1.msra.mxu0 0.0
      %361 = vmatprep.subr.mxu0 0.0
      %362 = vmatpush1.msra.mxu0 0.0
      %363 = vmatprep.subr.mxu0 0.0
      %364 = vmatpush1.msra.mxu0 0.0
      %365 = vmatprep.subr.mxu0 0.0
      %366 = vmatpush1.msra.mxu0 0.0
      %367 = vmatprep.subr.mxu0 0.0
      %368 = vmatpush1.msra.mxu0 0.0
      %369 = vmatprep.subr.mxu0 0.0
      %370 = vmatpush1.msra.mxu0 0.0
      %371 = vmatprep.subr.mxu0 0.0
      %372 = vmatpush1.msra.mxu0 0.0
      %373 = vmatprep.subr.mxu0 0.0
      %374 = vmatpush1.msra.mxu0 0.0
      %375 = vmatprep.subr.mxu0 0.0
      %376 = vmatpush1.msra.mxu0 0.0
      %377 = vmatprep.subr.mxu0 0.0
      %378 = vmatpush1.msra.mxu0 0.0
      %379 = vmatprep.subr.mxu0 0.0
      %380 = vmatpush1.msra.mxu0 0.0
      %381 = vmatprep.subr.mxu0 0.0
      %382 = vmatpush1.msra.mxu0 0.0
      %383 = vmatprep.subr.mxu0 0.0
      %384 = vmatpush1.msra.mxu0 0.0
      %385 = vmatprep.subr.mxu0 0.0
      %386 = vmatpush1.msra.mxu0 0.0
      %387 = vmatprep.subr.mxu0 0.0
      %388 = vmatpush1.msra.mxu0 0.0
      %389 = vmatprep.subr.mxu0 0.0
      %390 = vmatpush1.msra.mxu0 0.0
      %391 = vmatprep.subr.mxu0 0.0
      %392 = vmatpush1.msra.mxu0 0.0
      %393 = vmatprep.subr.mxu0 0.0
      %394 = vmatpush1.msra.mxu0 0.0
      %395 = vmatprep.subr.mxu0 0.0
      %396 = vmatpush1.msra.mxu0 0.0
      %397 = vmatprep.subr.mxu0 0.0
      %398 = vmatpush1.msra.mxu0 0.0
      %399 = vmatprep.subr.mxu0 0.0
      %400 = vmatpush1.msra.mxu0 0.0
      %401 = vmatprep.subr.mxu0 0.0
      %402 = vmatpush1.msra.mxu0 0.0
      %403 = vmatprep.mubr.f32.mxu0 0.0
      %404 = vmatmul.mubr.f32.gmra.mrb[0].mxu0 %v333
      %v405 = vpop.f32.mrb[0].mxu0
      %v406 = vadd.f32 0.0, %v405
      %v407 = vpop.f32.mrb[0].mxu0
      %408 = vdwg.mxu0
      %v410 = vsel %vm331, %v327, 0
      %v413 = vsel %vm335, %v328, 0
      %415 = vmatprep.subr.mxu0 0.0
      %416 = vmatpush1.msra.mxu0 %v413
      %417 = vmatprep.subr.mxu0 0.0
      %418 = vmatpush1.msra.mxu0 0.0
      %419 = vmatprep.subr.mxu0 0.0
      %420 = vmatpush1.msra.mxu0 0.0
      %421 = vmatprep.subr.mxu0 0.0
      %422 = vmatpush1.msra.mxu0 0.0
      %423 = vmatprep.subr.mxu0 0.0
      %424 = vmatpush1.msra.mxu0 0.0
      %425 = vmatprep.subr.mxu0 0.0
      %426 = vmatpush1.msra.mxu0 0.0
      %427 = vmatprep.subr.mxu0 0.0
      %428 = vmatpush1.msra.mxu0 0.0
      %429 = vmatprep.subr.mxu0 0.0
      %430 = vmatpush1.msra.mxu0 0.0
      %431 = vmatprep.subr.mxu0 0.0
      %432 = vmatpush1.msra.mxu0 0.0
      %433 = vmatprep.subr.mxu0 0.0
      %434 = vmatpush1.msra.mxu0 0.0
      %435 = vmatprep.subr.mxu0 0.0
      %436 = vmatpush1.msra.mxu0 0.0
      %437 = vmatprep.subr.mxu0 0.0
      %438 = vmatpush1.msra.mxu0 0.0
      %439 = vmatprep.subr.mxu0 0.0
      %440 = vmatpush1.msra.mxu0 0.0
      %441 = vmatprep.subr.mxu0 0.0
      %442 = vmatpush1.msra.mxu0 0.0
      %443 = vmatprep.subr.mxu0 0.0
      %444 = vmatpush1.msra.mxu0 0.0
      %445 = vmatprep.subr.mxu0 0.0
      %446 = vmatpush1.msra.mxu0 0.0
      %447 = vmatprep.subr.mxu0 0.0
      %448 = vmatpush1.msra.mxu0 0.0
      %449 = vmatprep.subr.mxu0 0.0
      %450 = vmatpush1.msra.mxu0 0.0
      %451 = vmatprep.subr.mxu0 0.0
      %452 = vmatpush1.msra.mxu0 0.0
      %453 = vmatprep.subr.mxu0 0.0
      %454 = vmatpush1.msra.mxu0 0.0
      %455 = vmatprep.subr.mxu0 0.0
      %456 = vmatpush1.msra.mxu0 0.0
      %457 = vmatprep.subr.mxu0 0.0
      %458 = vmatpush1.msra.mxu0 0.0
      %459 = vmatprep.subr.mxu0 0.0
      %460 = vmatpush1.msra.mxu0 0.0
      %461 = vmatprep.subr.mxu0 0.0
      %462 = vmatpush1.msra.mxu0 0.0
      %463 = vmatprep.subr.mxu0 0.0
      %464 = vmatpush1.msra.mxu0 0.0
      %465 = vmatprep.subr.mxu0 0.0
      %466 = vmatpush1.msra.mxu0 0.0
      %467 = vmatprep.subr.mxu0 0.0
      %468 = vmatpush1.msra.mxu0 0.0
      %469 = vmatprep.subr.mxu0 0.0
      %470 = vmatpush1.msra.mxu0 0.0
      %471 = vmatprep.subr.mxu0 0.0
      %472 = vmatpush1.msra.mxu0 0.0
      %473 = vmatprep.subr.mxu0 0.0
      %474 = vmatpush1.msra.mxu0 0.0
      %475 = vmatprep.subr.mxu0 0.0
      %476 = vmatpush1.msra.mxu0 0.0
      %477 = vmatprep.subr.mxu0 0.0
      %478 = vmatpush1.msra.mxu0 0.0
      %479 = vmatprep.mubr.f32.mxu0 0.0
      %480 = vmatmul.mubr.f32.gmra.mrb[0].mxu0 %v410
      %v481 = vpop.f32.mrb[0].mxu0
      %v482 = vadd.f32 %v406, %v481
      %v483 = vpop.f32.mrb[0].mxu0
      %484 = vdwg.mxu0
      %v485 = vld [vmem:[%s4] sm:$0xff]
      %487 = vset.pattern.permute.xlu0 0
      %488 = vperm.xlu0 %487, %v485
      %v489 = vpop.permute.xlu0 %488
      %v491 = vadd.f32 %v482, %v489
      %v492 = vmax.f32 %v491, 0.0
      %493 = vset.pattern.permute.xlu0 1
      %494 = vperm.xlu0 %493, %v485
      %v495 = vpop.permute.xlu0 %494
      %v497 = vmul.f32 %v492, %v495
      %v498 = vrot.slane %v497, 4
      %v499 = vadd.f32 %v497, %v498
      %v500 = vrot.slane %v499, 2
      %v501 = vadd.f32 %v499, %v500
      %v502 = vrot.slane %v501, 1
      %v503 = vadd.f32 %v501, %v502
      %504 = vst [vmem:[%s317] sm:$0x1] %v503
      %505 = vadd.xlane.f32.xlu0 %v503
      %v506 = vpop.xlane.xlu0 %505
      %v507 = vmul.f32 %v503, %v503
      %508 = vadd.xlane.f32.xlu0 %v507
      %v509 = vpop.xlane.xlu0 %508
      %vm510 = vcmask 7168
      %v511 = vsel %vm510, %v506, %v509
      %v512 = vld [vmem:[%s320] sm:$0x1]
      %v513 = vadd.f32 %v512, %v511
      %vm514 = vcmask 8192
      %515 = vst.msk [vmem:[%s320] sm:$0x1] %vm514, %v513
      %p516 = scmp.lt.s32.totalorder %s22, 1
      %s517 = scalar_select %p516, %s22, 1
      %p518 = scmp.lt.s32.totalorder %s23, 1
      %s519 = scalar_select %p518, %s23, 1
      %s520 = smul.addr %s517, 2
      %s521 = sadd.s32 %s519, %s520
      %s522 = scalar_lea.vmem %s5, %s521
      %p523 = scmp.lt.s32.totalorder %s22, 1
      %s524 = scalar_select %p523, %s22, 1
      %s525 = scalar_lea.vmem %s6, %s524
      // Predicated region
      $region45: #{attention_block.4} parent=39 // pred_check
        %p526 = pneg %p169
      $region46: #{attention_block.4} parent=39 // pred_check_branch
        %528 = sbr.rel (%p526) target = $region48
      $region47: #{attention_block.4} parent=39 // pred_region
        _
      $region48: #{attention_block.4} parent=39 // pred_fallthru
        _
      // Predicated region
      $region49: #{attention_block.4} parent=39 // pred_check
        %p529 = pneg %p195
      $region50: #{attention_block.4} parent=39 // pred_check_branch
        %531 = sbr.rel (%p529) target = $region52
      $region51: #{attention_block.4} parent=39 // pred_region
        _
      $region52: #{attention_block.4} parent=39 // pred_fallthru
        _
    $region40: #{attention_block.4} parent=5 // pred_fallthru
      _
    %p532 = scmp.le.s32.totalorder 2, %s13
    // Predicated region
    $region53: #{attention_block.4} parent=5 // pred_check
      %p533 = pneg %p532
    $region54: #{attention_block.4} parent=5 // pred_check_branch
      %535 = sbr.rel (%p533) target = $region56
    $region55: #{attention_block.4} parent=5 // pred_region
      %s536 = ssub.s32 %s13, 2
      // Predicated region
      $region57: #{attention_block.4} parent=55 // pred_check
        %p537 = pneg %p175
      $region58: #{attention_block.4} parent=55 // pred_check_branch
        %539 = sbr.rel (%p537) target = $region60
      $region59: #{attention_block.4} parent=55 // pred_region
        %p540 = scmp.lt.s32.totalorder %s24, 1
        %s541 = scalar_select %p540, %s24, 1
        %p542 = scmp.lt.s32.totalorder %s25, 1
        %s543 = scalar_select %p542, %s25, 1
        %s544 = smul.addr %s541, 2
        %s545 = sadd.s32 %s543, %s544
        %s546 = scalar_lea.vmem %s5, %s545
      $region60: #{attention_block.4} parent=55 // pred_fallthru
        _
      // Predicated region
      $region61: #{attention_block.4} parent=55 // pred_check
        %p547 = pneg %p201
      $region62: #{attention_block.4} parent=55 // pred_check_branch
        %549 = sbr.rel (%p547) target = $region64
      $region63: #{attention_block.4} parent=55 // pred_region
        %p550 = scmp.lt.s32.totalorder %s24, 1
        %s551 = scalar_select %p550, %s24, 1
        %s552 = scalar_lea.vmem %s6, %s551
      $region64: #{attention_block.4} parent=55 // pred_fallthru
        _
    $region56: #{attention_block.4} parent=5 // pred_fallthru
      _
  $region6: #{attention_block.4} parent=0 // loop_footer
    %s17 = sadd.s32 1, %s13
  $region7: #{attention_block.4} parent=0 // loop_footer_branch
    %12 = sbr.rel target = $region3
  $region8: #{attention_block.4} parent=0 // loop_exit
    _

</llo_original>
